<compile_context>
chip_gen: v7x
topology: tpu7x:2x2x1
jax: 0.10.0
libtpu: 0.0.40
codegen_flags: <defaults>
</compile_context>

<pallas_src>
import functools

import numpy as np
import jax
import jax.numpy as jnp
from jax import lax
from jax.experimental import pallas as pl
from jax.experimental.pallas import tpu as pltpu

EPS = 1e-5     # F.instance_norm default eps
SLOPE = 0.2    # leaky_relu negative slope

# 3x3 taps in (dy, dx) order; index t == 3*(dy+1) + (dx+1) == 3*ki + kj,
# matching the row-major flattening of the kernel's (ki, kj) axes.
TAPS = tuple((dy, dx) for dy in (-1, 0, 1) for dx in (-1, 0, 1))


# --------------------------------------------------------------------------
# Fused kernel: one fixed-point iteration, one batch sample per grid point
#   Z <- triDiagSolve(getNoNlinRHS(Z, X))
# State layout: z_ref is (L*C, H*W): row = layer*C + channel, lanes = pixels.
# --------------------------------------------------------------------------
def _fused_kernel(w1_ref, w2_ref, mask_ref, x_ref, x0_ref, z_ref, col_ref,
                  *, L, C, H, W):
    HW = H * W
    LC = L * C
    it = pl.program_id(1)              # fixed-point iteration (innermost axis)

    @pl.when(it == 0)
    def _():                            # Z starts at zero for every batch tile
        z_ref[...] = jnp.zeros_like(z_ref)

    def build_im2col(act):
        # act: (L*C, HW).  For every 3x3 tap, shift the flattened image by
        # dy*W + dx with an XLU lane rotation, zero the out-of-image pixels
        # with the precomputed mask, and store the lane-dense slab.
        for t, (dy, dx) in enumerate(TAPS):
            s = (-(dy * W + dx)) % HW            # roll semantics: out[p] = act[p - s]
            shifted = act if s == 0 else pltpu.roll(act, shift=s, axis=1)
            col_ref[pl.ds(t * LC, LC), :] = shifted * mask_ref[t:t + 1, :]

    # ---- phase 1: nonlinear RHS, all layers fused via block-diag weights ----
    #   dz  = conv2d(Z, K)          : one (LC, 9LC) @ (9LC, HW) MXU dot
    #   act = leaky_relu(instance_norm(dz))
    #   Y   = -conv_transpose2d(act, K)   (the minus is folded into w2)
    build_im2col(z_ref[...])
    dz = jnp.dot(w1_ref[...], col_ref[...], preferred_element_type=jnp.float32)
    # instance norm per (layer, channel) row over the spatial lane axis
    mean = jnp.sum(dz, axis=1, keepdims=True) * (1.0 / HW)
    cen = dz - mean
    var = jnp.sum(cen * cen, axis=1, keepdims=True) * (1.0 / HW)
    act = cen * lax.rsqrt(var + EPS)
    act = jnp.maximum(act, SLOPE * act)              # leaky_relu(0.2)
    build_im2col(act)
    z_ref[...] = jnp.dot(w2_ref[...], col_ref[...],
                         preferred_element_type=jnp.float32)
    z_ref[pl.ds((L - 1) * C, C), :] += x_ref[...]    # Y[-1] += X
    z_ref[pl.ds(0, C), :] += x0_ref[...]             # Y[0]  += X0

    def lyr(i):
        return (pl.ds(i * C, C), slice(None))

    # ---- phase 2: forward tridiagonal sweep (sequential over layers) ----
    z_ref[lyr(0)] = np.float32(np.sqrt(0.5)) * z_ref[lyr(0)]
    for i in range(1, L):
        a = np.float32(np.sqrt((i + 1) / (i + 2)))
        b = np.float32(np.sqrt(i / (i + 1)))
        z_ref[lyr(i)] = a * (b * z_ref[lyr(i - 1)] + z_ref[lyr(i)])

    # ---- phase 3: backward tridiagonal sweep ----
    aN = np.float32(np.sqrt(L / (L + 1.0)))
    z_ref[lyr(L - 1)] = aN * z_ref[lyr(L - 1)]
    for i in range(L - 2, -1, -1):
        a = np.float32(np.sqrt((i + 1) / (i + 2)))
        z_ref[lyr(i)] = a * (a * z_ref[lyr(i + 1)] + z_ref[lyr(i)])


# --------------------------------------------------------------------------
# pallas_call builder
# --------------------------------------------------------------------------
def _make_fused_call(L, B, C, H, W, nfix):
    HW = H * W
    LC = L * C

    grid_spec = pltpu.PrefetchScalarGridSpec(
        num_scalar_prefetch=0,
        grid=(B, nfix),                 # (batch tile, fixed-point iteration)
        in_specs=[
            pl.BlockSpec((LC, 9 * LC), lambda b, it: (0, 0)),   # w1 (conv)
            pl.BlockSpec((LC, 9 * LC), lambda b, it: (0, 0)),   # w2 (-conv_T)
            pl.BlockSpec((9, HW), lambda b, it: (0, 0)),        # border masks
            pl.BlockSpec((C, HW), lambda b, it: (0, b)),        # X batch tile
            pl.BlockSpec((C, HW), lambda b, it: (0, 0)),        # X0
        ],
        # The output block index is constant along the fixed-point axis, so
        # the Z state stays resident in VMEM across all iterations of a tile.
        out_specs=pl.BlockSpec((LC, HW), lambda b, it: (0, b)),
        scratch_shapes=[
            pltpu.VMEM((9 * LC, HW), jnp.float32),   # shared im2col buffer
        ],
    )
    return pl.pallas_call(
        functools.partial(_fused_kernel, L=L, C=C, H=H, W=W),
        out_shape=jax.ShapeDtypeStruct((LC, B * HW), jnp.float32),
        grid_spec=grid_spec,
        compiler_params=pltpu.CompilerParams(
            # Batch samples are fully independent -> shard across TensorCores
            # (v7x).  The fixed-point recurrence must stay sequential.
            dimension_semantics=("parallel", "arbitrary"),
            vmem_limit_bytes=32 * 1024 * 1024,
        ),
    )


def _make_tap_masks(H, W):
    """(9, H*W) float32: 1 where the tap's shifted source pixel is in-image."""
    HW = H * W
    yy, xx = np.divmod(np.arange(HW), W)
    m = np.zeros((len(TAPS), HW), np.float32)
    for t, (dy, dx) in enumerate(TAPS):
        ok = (yy + dy >= 0) & (yy + dy < H) & (xx + dx >= 0) & (xx + dx < W)
        m[t] = ok.astype(np.float32)
    return jnp.asarray(m)


# --------------------------------------------------------------------------
# Full forward (mirrors leastActionNet.forward with Z initialised to zeros)
# --------------------------------------------------------------------------
def least_action_forward(X, K, X0, *, nfix):
    L, C = K.shape[0], K.shape[1]
    B, _, H, W = X.shape
    HW = H * W
    LC = L * C

    if nfix <= 0:
        Z = jnp.zeros((L,) + X.shape, jnp.float32)
        return Z[-1], Z

    K = K.astype(jnp.float32)
    # Block-diagonal, tap-major packed weights (L*C, 9*L*C):
    #   w1[l*C+o, t*LC + l*C + i] =  K[l, o, i, ki, kj]        (conv2d)
    #   w2[l*C+o, t*LC + l*C + i] = -K[l, i, o, 2-ki, 2-kj]    (-conv_transpose2d)
    # with t = 3*ki + kj (same order as TAPS).
    eye = jnp.eye(L, dtype=jnp.float32)
    k1p = jnp.transpose(K, (0, 1, 3, 4, 2)).reshape(L, C, 9, C)
    w1 = jnp.einsum('lotc,lm->lotmc', k1p, eye).reshape(LC, 9 * LC)
    kflip = K[:, :, :, ::-1, ::-1]
    k2p = jnp.transpose(kflip, (0, 2, 3, 4, 1)).reshape(L, C, 9, C)
    w2 = jnp.einsum('lotc,lm->lotmc', -k2p, eye).reshape(LC, 9 * LC)
    # TODO(synk): for large L*C switch back to per-layer weights plus a layer
    # grid/fori axis; the block-diagonal form grows as 9*(L*C)^2.

    masks = _make_tap_masks(H, W)

    # Lane-dense activations: channels on sublanes, flattened pixels on lanes.
    x_cb = jnp.transpose(X.astype(jnp.float32), (1, 0, 2, 3)).reshape(C, B * HW)
    x0_cb = X0.astype(jnp.float32).reshape(C, HW)

    z_flat = _make_fused_call(L, B, C, H, W, nfix)(w1, w2, masks, x_cb, x0_cb)
    Z = jnp.transpose(z_flat.reshape(L, C, B, H, W), (0, 2, 1, 3, 4))
    return Z[-1], Z


# --------------------------------------------------------------------------
# Pure-JAX reference (mirrors the PyTorch module) for a numerical self-check
# --------------------------------------------------------------------------
def reference_forward(X, K, X0, nfix):
    L = K.shape[0]

    def layer(Zl, Kl):
        dZ = lax.conv_general_dilated(Zl, Kl, (1, 1), ((1, 1), (1, 1)),
                                      dimension_numbers=("NCHW", "OIHW", "NCHW"),
                                      precision=lax.Precision.HIGHEST)
        mean = dZ.mean(axis=(2, 3), keepdims=True)
        var = ((dZ - mean) ** 2).mean(axis=(2, 3), keepdims=True)
        dZ = (dZ - mean) / jnp.sqrt(var + EPS)
        dZ = jnp.where(dZ > 0, dZ, SLOPE * dZ)
        Kt = jnp.transpose(Kl, (1, 0, 2, 3))[:, :, ::-1, ::-1]
        return lax.conv_general_dilated(dZ, Kt, (1, 1), ((1, 1), (1, 1)),
                                        dimension_numbers=("NCHW", "OIHW", "NCHW"),
                                        precision=lax.Precision.HIGHEST)

    Z = jnp.zeros((L,) + X.shape, X.dtype)
    for _ in range(nfix):
        Y = jnp.stack([-layer(Z[i], K[i]) for i in range(L)])
        Y = Y.at[-1].add(X)
        Y = Y.at[0].add(X0)
        ys = [None] * L
        ys[0] = np.float32(np.sqrt(0.5)) * Y[0]
        for i in range(1, L):
            a = np.float32(np.sqrt((i + 1) / (i + 2)))
            b = np.float32(np.sqrt(i / (i + 1)))
            ys[i] = a * (b * ys[i - 1] + Y[i])
        ws = [None] * L
        aN = np.float32(np.sqrt(L / (L + 1)))
        ws[-1] = aN * ys[-1]
        for i in reversed(range(L - 1)):
            a = np.float32(np.sqrt((i + 1) / (i + 2)))
            ws[i] = a * (a * ws[i + 1] + ys[i])
        Z = jnp.stack(ws)
    return Z[-1], Z


if __name__ == "__main__":
    nlayers, C, H, W, B = 4, 4, 16, 16, 2
    nfix = 2

    key = jax.random.PRNGKey(0)
    k1, k2, k3 = jax.random.split(key, 3)

    # deterministic xavier_uniform-style init (matching the __init__ shapes)
    bound_k = float(np.sqrt(6.0 / (C * 9 + C * 9)))
    K = jax.random.uniform(k1, (nlayers, C, C, 3, 3), jnp.float32, -bound_k, bound_k)
    bound_x0 = float(np.sqrt(6.0 / (C * H * W + 1 * H * W)))
    X0 = jax.random.uniform(k2, (1, C, H, W), jnp.float32, -bound_x0, bound_x0)
    X = jax.random.normal(k3, (B, C, H, W), jnp.float32)

    fwd_fn = jax.jit(functools.partial(least_action_forward, nfix=nfix))
    zN, zAll = fwd_fn(X, K, X0)
    jax.block_until_ready((zN, zAll))

    zN_ref, zAll_ref = reference_forward(X, K, X0, nfix)
    # Tolerance covers the MXU's (possibly reduced-precision) default f32 dot
    # path now that HIGHEST precision is dropped; typical observed error on
    # the full-f32 path is ~1e-6.  Structural bugs would show up at O(0.1-1).
    np.testing.assert_allclose(np.asarray(zAll), np.asarray(zAll_ref),
                               rtol=1e-2, atol=1e-2)
    np.testing.assert_allclose(np.asarray(zN), np.asarray(zN_ref),
                               rtol=1e-2, atol=1e-2)

    print("KERNEL_OK")
</pallas_src>

<mosaic_0001>
module attributes {stable_mosaic.version = 11 : i64} {
  func.func @_fused_kernel(%arg0: i32, %arg1: i32, %arg2: memref<16x144xf32, #tpu.memory_space<vmem>>, %arg3: memref<16x144xf32, #tpu.memory_space<vmem>>, %arg4: memref<9x256xf32, #tpu.memory_space<vmem>>, %arg5: memref<4x256xf32, #tpu.memory_space<vmem>>, %arg6: memref<4x256xf32, #tpu.memory_space<vmem>>, %arg7: memref<16x256xf32, #tpu.memory_space<vmem>>, %arg8: memref<144x256xf32, #tpu.memory_space<vmem>>) attributes {dimension_semantics = [#tpu.dimension_semantics<parallel>, #tpu.dimension_semantics<arbitrary>], iteration_bounds = array<i64: 2, 2>, scalar_prefetch = 0 : i64, scratch_operands = 1 : i64, tpu.core_type = #tpu.core_type<tc>, window_params = [{pipeline_mode = #tpu.pipeline_mode<synchronous>, transform_indices = @transform_0, window_bounds = array<i64: 16, 144>}, {pipeline_mode = #tpu.pipeline_mode<synchronous>, transform_indices = @transform_1, window_bounds = array<i64: 16, 144>}, {pipeline_mode = #tpu.pipeline_mode<synchronous>, transform_indices = @transform_2, window_bounds = array<i64: 9, 256>}, {transform_indices = @transform_3, window_bounds = array<i64: 4, 256>}, {pipeline_mode = #tpu.pipeline_mode<synchronous>, transform_indices = @transform_4, window_bounds = array<i64: 4, 256>}, {transform_indices = @transform_5, window_bounds = array<i64: 16, 256>}]} {
    %c0_i32 = arith.constant 0 : i32
    %0 = arith.cmpi eq, %arg1, %c0_i32 : i32
    %1 = arith.extui %0 : i1 to i32
    %c0_i32_0 = arith.constant 0 : i32
    %2 = arith.cmpi ne, %1, %c0_i32_0 : i32
    scf.if %2 {
      %cst_152 = arith.constant 0.000000e+00 : f32
      %182 = vector.broadcast %cst_152 : f32 to vector<16x256xf32>
      %c0_153 = arith.constant 0 : index
      %c0_154 = arith.constant 0 : index
      %183 = vector.load %arg7[%c0_153, %c0_154] : memref<16x256xf32, #tpu.memory_space<vmem>>, vector<16x256xf32>
      tpu.vector_store %arg7[%c0_153, %c0_154], %182 {strides = array<i32>} : memref<16x256xf32, #tpu.memory_space<vmem>>, vector<16x256xf32>,
    } else {
    }
    %c0 = arith.constant 0 : index
    %c0_1 = arith.constant 0 : index
    %3 = vector.load %arg7[%c0, %c0_1] : memref<16x256xf32, #tpu.memory_space<vmem>>, vector<16x256xf32>
    %c17_i32 = arith.constant 17 : i32
    %4 = tpu.dynamic_rotate %3 by %c17_i32 dim 1 : vector<16x256xf32>, i32 -> vector<16x256xf32>
    %c0_2 = arith.constant 0 : index
    %c0_3 = arith.constant 0 : index
    %5 = vector.load %arg4[%c0_2, %c0_3] : memref<9x256xf32, #tpu.memory_space<vmem>>, vector<1x256xf32>
    %6 = vector.broadcast %5 : vector<1x256xf32> to vector<16x256xf32>
    %7 = arith.mulf %4, %6 : vector<16x256xf32>
    %c0_4 = arith.constant 0 : index
    %c0_5 = arith.constant 0 : index
    %8 = vector.load %arg8[%c0_4, %c0_5] : memref<144x256xf32, #tpu.memory_space<vmem>>, vector<16x256xf32>
    tpu.vector_store %arg8[%c0_4, %c0_5], %7 {strides = array<i32>} : memref<144x256xf32, #tpu.memory_space<vmem>>, vector<16x256xf32>,
    %c16_i32 = arith.constant 16 : i32
    %9 = tpu.dynamic_rotate %3 by %c16_i32 dim 1 : vector<16x256xf32>, i32 -> vector<16x256xf32>
    %c1 = arith.constant 1 : index
    %c0_6 = arith.constant 0 : index
    %10 = vector.load %arg4[%c1, %c0_6] : memref<9x256xf32, #tpu.memory_space<vmem>>, vector<1x256xf32>
    %11 = vector.broadcast %10 : vector<1x256xf32> to vector<16x256xf32>
    %12 = arith.mulf %9, %11 : vector<16x256xf32>
    %c16 = arith.constant 16 : index
    %c0_7 = arith.constant 0 : index
    %13 = vector.load %arg8[%c16, %c0_7] : memref<144x256xf32, #tpu.memory_space<vmem>>, vector<16x256xf32>
    tpu.vector_store %arg8[%c16, %c0_7], %12 {strides = array<i32>} : memref<144x256xf32, #tpu.memory_space<vmem>>, vector<16x256xf32>,
    %c15_i32 = arith.constant 15 : i32
    %14 = tpu.dynamic_rotate %3 by %c15_i32 dim 1 : vector<16x256xf32>, i32 -> vector<16x256xf32>
    %c2 = arith.constant 2 : index
    %c0_8 = arith.constant 0 : index
    %15 = vector.load %arg4[%c2, %c0_8] : memref<9x256xf32, #tpu.memory_space<vmem>>, vector<1x256xf32>
    %16 = vector.broadcast %15 : vector<1x256xf32> to vector<16x256xf32>
    %17 = arith.mulf %14, %16 : vector<16x256xf32>
    %c32 = arith.constant 32 : index
    %c0_9 = arith.constant 0 : index
    %18 = vector.load %arg8[%c32, %c0_9] : memref<144x256xf32, #tpu.memory_space<vmem>>, vector<16x256xf32>
    tpu.vector_store %arg8[%c32, %c0_9], %17 {strides = array<i32>} : memref<144x256xf32, #tpu.memory_space<vmem>>, vector<16x256xf32>,
    %c1_i32 = arith.constant 1 : i32
    %19 = tpu.dynamic_rotate %3 by %c1_i32 dim 1 : vector<16x256xf32>, i32 -> vector<16x256xf32>
    %c3 = arith.constant 3 : index
    %c0_10 = arith.constant 0 : index
    %20 = vector.load %arg4[%c3, %c0_10] : memref<9x256xf32, #tpu.memory_space<vmem>>, vector<1x256xf32>
    %21 = vector.broadcast %20 : vector<1x256xf32> to vector<16x256xf32>
    %22 = arith.mulf %19, %21 : vector<16x256xf32>
    %c48 = arith.constant 48 : index
    %c0_11 = arith.constant 0 : index
    %23 = vector.load %arg8[%c48, %c0_11] : memref<144x256xf32, #tpu.memory_space<vmem>>, vector<16x256xf32>
    tpu.vector_store %arg8[%c48, %c0_11], %22 {strides = array<i32>} : memref<144x256xf32, #tpu.memory_space<vmem>>, vector<16x256xf32>,
    %c4 = arith.constant 4 : index
    %c0_12 = arith.constant 0 : index
    %24 = vector.load %arg4[%c4, %c0_12] : memref<9x256xf32, #tpu.memory_space<vmem>>, vector<1x256xf32>
    %25 = vector.broadcast %24 : vector<1x256xf32> to vector<16x256xf32>
    %26 = arith.mulf %3, %25 : vector<16x256xf32>
    %c64 = arith.constant 64 : index
    %c0_13 = arith.constant 0 : index
    %27 = vector.load %arg8[%c64, %c0_13] : memref<144x256xf32, #tpu.memory_space<vmem>>, vector<16x256xf32>
    tpu.vector_store %arg8[%c64, %c0_13], %26 {strides = array<i32>} : memref<144x256xf32, #tpu.memory_space<vmem>>, vector<16x256xf32>,
    %c255_i32 = arith.constant 255 : i32
    %28 = tpu.dynamic_rotate %3 by %c255_i32 dim 1 : vector<16x256xf32>, i32 -> vector<16x256xf32>
    %c5 = arith.constant 5 : index
    %c0_14 = arith.constant 0 : index
    %29 = vector.load %arg4[%c5, %c0_14] : memref<9x256xf32, #tpu.memory_space<vmem>>, vector<1x256xf32>
    %30 = vector.broadcast %29 : vector<1x256xf32> to vector<16x256xf32>
    %31 = arith.mulf %28, %30 : vector<16x256xf32>
    %c80 = arith.constant 80 : index
    %c0_15 = arith.constant 0 : index
    %32 = vector.load %arg8[%c80, %c0_15] : memref<144x256xf32, #tpu.memory_space<vmem>>, vector<16x256xf32>
    tpu.vector_store %arg8[%c80, %c0_15], %31 {strides = array<i32>} : memref<144x256xf32, #tpu.memory_space<vmem>>, vector<16x256xf32>,
    %c241_i32 = arith.constant 241 : i32
    %33 = tpu.dynamic_rotate %3 by %c241_i32 dim 1 : vector<16x256xf32>, i32 -> vector<16x256xf32>
    %c6 = arith.constant 6 : index
    %c0_16 = arith.constant 0 : index
    %34 = vector.load %arg4[%c6, %c0_16] : memref<9x256xf32, #tpu.memory_space<vmem>>, vector<1x256xf32>
    %35 = vector.broadcast %34 : vector<1x256xf32> to vector<16x256xf32>
    %36 = arith.mulf %33, %35 : vector<16x256xf32>
    %c96 = arith.constant 96 : index
    %c0_17 = arith.constant 0 : index
    %37 = vector.load %arg8[%c96, %c0_17] : memref<144x256xf32, #tpu.memory_space<vmem>>, vector<16x256xf32>
    tpu.vector_store %arg8[%c96, %c0_17], %36 {strides = array<i32>} : memref<144x256xf32, #tpu.memory_space<vmem>>, vector<16x256xf32>,
    %c240_i32 = arith.constant 240 : i32
    %38 = tpu.dynamic_rotate %3 by %c240_i32 dim 1 : vector<16x256xf32>, i32 -> vector<16x256xf32>
    %c7 = arith.constant 7 : index
    %c0_18 = arith.constant 0 : index
    %39 = vector.load %arg4[%c7, %c0_18] : memref<9x256xf32, #tpu.memory_space<vmem>>, vector<1x256xf32>
    %40 = vector.broadcast %39 : vector<1x256xf32> to vector<16x256xf32>
    %41 = arith.mulf %38, %40 : vector<16x256xf32>
    %c112 = arith.constant 112 : index
    %c0_19 = arith.constant 0 : index
    %42 = vector.load %arg8[%c112, %c0_19] : memref<144x256xf32, #tpu.memory_space<vmem>>, vector<16x256xf32>
    tpu.vector_store %arg8[%c112, %c0_19], %41 {strides = array<i32>} : memref<144x256xf32, #tpu.memory_space<vmem>>, vector<16x256xf32>,
    %c239_i32 = arith.constant 239 : i32
    %43 = tpu.dynamic_rotate %3 by %c239_i32 dim 1 : vector<16x256xf32>, i32 -> vector<16x256xf32>
    %c8 = arith.constant 8 : index
    %c0_20 = arith.constant 0 : index
    %44 = vector.load %arg4[%c8, %c0_20] : memref<9x256xf32, #tpu.memory_space<vmem>>, vector<1x256xf32>
    %45 = vector.broadcast %44 : vector<1x256xf32> to vector<16x256xf32>
    %46 = arith.mulf %43, %45 : vector<16x256xf32>
    %c128 = arith.constant 128 : index
    %c0_21 = arith.constant 0 : index
    %47 = vector.load %arg8[%c128, %c0_21] : memref<144x256xf32, #tpu.memory_space<vmem>>, vector<16x256xf32>
    tpu.vector_store %arg8[%c128, %c0_21], %46 {strides = array<i32>} : memref<144x256xf32, #tpu.memory_space<vmem>>, vector<16x256xf32>,
    %c0_22 = arith.constant 0 : index
    %c0_23 = arith.constant 0 : index
    %48 = vector.load %arg2[%c0_22, %c0_23] : memref<16x144xf32, #tpu.memory_space<vmem>>, vector<16x144xf32>
    %c0_24 = arith.constant 0 : index
    %c0_25 = arith.constant 0 : index
    %49 = vector.load %arg8[%c0_24, %c0_25] : memref<144x256xf32, #tpu.memory_space<vmem>>, vector<144x256xf32>
    %cst = arith.constant dense<0.000000e+00> : vector<16x256xf32>
    %50 = tpu.matmul %48, %49, %cst {dimension_numbers = #tpu.dot_dimension_numbers<[1], [0], [0], [1], [0, 0, 1, 1], [], []>} : vector<16x144xf32>, vector<144x256xf32>, vector<16x256xf32> -> vector<16x256xf32>
    %cst_26 = arith.constant dense<0.000000e+00> : vector<16xf32>
    %51 = vector.multi_reduction <add>, %50, %cst_26 [1] : vector<16x256xf32> to vector<16xf32>
    %52 = vector.shape_cast %51 : vector<16xf32> to vector<16x1xf32>
    %cst_27 = arith.constant 3.906250e-03 : f32
    %53 = vector.broadcast %cst_27 : f32 to vector<16x1xf32>
    %54 = arith.mulf %52, %53 : vector<16x1xf32>
    %55 = vector.broadcast %54 : vector<16x1xf32> to vector<16x256xf32>
    %56 = arith.subf %50, %55 : vector<16x256xf32>
    %57 = arith.mulf %56, %56 : vector<16x256xf32>
    %cst_28 = arith.constant dense<0.000000e+00> : vector<16xf32>
    %58 = vector.multi_reduction <add>, %57, %cst_28 [1] : vector<16x256xf32> to vector<16xf32>
    %59 = vector.shape_cast %58 : vector<16xf32> to vector<16x1xf32>
    %cst_29 = arith.constant 3.906250e-03 : f32
    %60 = vector.broadcast %cst_29 : f32 to vector<16x1xf32>
    %61 = arith.mulf %59, %60 : vector<16x1xf32>
    %cst_30 = arith.constant 9.99999974E-6 : f32
    %62 = vector.broadcast %cst_30 : f32 to vector<16x1xf32>
    %63 = arith.addf %61, %62 : vector<16x1xf32>
    %64 = math.rsqrt %63 : vector<16x1xf32>
    %65 = vector.broadcast %64 : vector<16x1xf32> to vector<16x256xf32>
    %66 = arith.mulf %56, %65 : vector<16x256xf32>
    %cst_31 = arith.constant 2.000000e-01 : f32
    %67 = vector.broadcast %cst_31 : f32 to vector<16x256xf32>
    %68 = arith.mulf %67, %66 : vector<16x256xf32>
    %69 = arith.maximumf %66, %68 : vector<16x256xf32>
    %c17_i32_32 = arith.constant 17 : i32
    %70 = tpu.dynamic_rotate %69 by %c17_i32_32 dim 1 : vector<16x256xf32>, i32 -> vector<16x256xf32>
    %c0_33 = arith.constant 0 : index
    %c0_34 = arith.constant 0 : index
    %71 = vector.load %arg4[%c0_33, %c0_34] : memref<9x256xf32, #tpu.memory_space<vmem>>, vector<1x256xf32>
    %72 = vector.broadcast %71 : vector<1x256xf32> to vector<16x256xf32>
    %73 = arith.mulf %70, %72 : vector<16x256xf32>
    %c0_35 = arith.constant 0 : index
    %c0_36 = arith.constant 0 : index
    %74 = vector.load %arg8[%c0_35, %c0_36] : memref<144x256xf32, #tpu.memory_space<vmem>>, vector<16x256xf32>
    tpu.vector_store %arg8[%c0_35, %c0_36], %73 {strides = array<i32>} : memref<144x256xf32, #tpu.memory_space<vmem>>, vector<16x256xf32>,
    %c16_i32_37 = arith.constant 16 : i32
    %75 = tpu.dynamic_rotate %69 by %c16_i32_37 dim 1 : vector<16x256xf32>, i32 -> vector<16x256xf32>
    %c1_38 = arith.constant 1 : index
    %c0_39 = arith.constant 0 : index
    %76 = vector.load %arg4[%c1_38, %c0_39] : memref<9x256xf32, #tpu.memory_space<vmem>>, vector<1x256xf32>
    %77 = vector.broadcast %76 : vector<1x256xf32> to vector<16x256xf32>
    %78 = arith.mulf %75, %77 : vector<16x256xf32>
    %c16_40 = arith.constant 16 : index
    %c0_41 = arith.constant 0 : index
    %79 = vector.load %arg8[%c16_40, %c0_41] : memref<144x256xf32, #tpu.memory_space<vmem>>, vector<16x256xf32>
    tpu.vector_store %arg8[%c16_40, %c0_41], %78 {strides = array<i32>} : memref<144x256xf32, #tpu.memory_space<vmem>>, vector<16x256xf32>,
    %c15_i32_42 = arith.constant 15 : i32
    %80 = tpu.dynamic_rotate %69 by %c15_i32_42 dim 1 : vector<16x256xf32>, i32 -> vector<16x256xf32>
    %c2_43 = arith.constant 2 : index
    %c0_44 = arith.constant 0 : index
    %81 = vector.load %arg4[%c2_43, %c0_44] : memref<9x256xf32, #tpu.memory_space<vmem>>, vector<1x256xf32>
    %82 = vector.broadcast %81 : vector<1x256xf32> to vector<16x256xf32>
    %83 = arith.mulf %80, %82 : vector<16x256xf32>
    %c32_45 = arith.constant 32 : index
    %c0_46 = arith.constant 0 : index
    %84 = vector.load %arg8[%c32_45, %c0_46] : memref<144x256xf32, #tpu.memory_space<vmem>>, vector<16x256xf32>
    tpu.vector_store %arg8[%c32_45, %c0_46], %83 {strides = array<i32>} : memref<144x256xf32, #tpu.memory_space<vmem>>, vector<16x256xf32>,
    %c1_i32_47 = arith.constant 1 : i32
    %85 = tpu.dynamic_rotate %69 by %c1_i32_47 dim 1 : vector<16x256xf32>, i32 -> vector<16x256xf32>
    %c3_48 = arith.constant 3 : index
    %c0_49 = arith.constant 0 : index
    %86 = vector.load %arg4[%c3_48, %c0_49] : memref<9x256xf32, #tpu.memory_space<vmem>>, vector<1x256xf32>
    %87 = vector.broadcast %86 : vector<1x256xf32> to vector<16x256xf32>
    %88 = arith.mulf %85, %87 : vector<16x256xf32>
    %c48_50 = arith.constant 48 : index
    %c0_51 = arith.constant 0 : index
    %89 = vector.load %arg8[%c48_50, %c0_51] : memref<144x256xf32, #tpu.memory_space<vmem>>, vector<16x256xf32>
    tpu.vector_store %arg8[%c48_50, %c0_51], %88 {strides = array<i32>} : memref<144x256xf32, #tpu.memory_space<vmem>>, vector<16x256xf32>,
    %c4_52 = arith.constant 4 : index
    %c0_53 = arith.constant 0 : index
    %90 = vector.load %arg4[%c4_52, %c0_53] : memref<9x256xf32, #tpu.memory_space<vmem>>, vector<1x256xf32>
    %91 = vector.broadcast %90 : vector<1x256xf32> to vector<16x256xf32>
    %92 = arith.mulf %69, %91 : vector<16x256xf32>
    %c64_54 = arith.constant 64 : index
    %c0_55 = arith.constant 0 : index
    %93 = vector.load %arg8[%c64_54, %c0_55] : memref<144x256xf32, #tpu.memory_space<vmem>>, vector<16x256xf32>
    tpu.vector_store %arg8[%c64_54, %c0_55], %92 {strides = array<i32>} : memref<144x256xf32, #tpu.memory_space<vmem>>, vector<16x256xf32>,
    %c255_i32_56 = arith.constant 255 : i32
    %94 = tpu.dynamic_rotate %69 by %c255_i32_56 dim 1 : vector<16x256xf32>, i32 -> vector<16x256xf32>
    %c5_57 = arith.constant 5 : index
    %c0_58 = arith.constant 0 : index
    %95 = vector.load %arg4[%c5_57, %c0_58] : memref<9x256xf32, #tpu.memory_space<vmem>>, vector<1x256xf32>
    %96 = vector.broadcast %95 : vector<1x256xf32> to vector<16x256xf32>
    %97 = arith.mulf %94, %96 : vector<16x256xf32>
    %c80_59 = arith.constant 80 : index
    %c0_60 = arith.constant 0 : index
    %98 = vector.load %arg8[%c80_59, %c0_60] : memref<144x256xf32, #tpu.memory_space<vmem>>, vector<16x256xf32>
    tpu.vector_store %arg8[%c80_59, %c0_60], %97 {strides = array<i32>} : memref<144x256xf32, #tpu.memory_space<vmem>>, vector<16x256xf32>,
    %c241_i32_61 = arith.constant 241 : i32
    %99 = tpu.dynamic_rotate %69 by %c241_i32_61 dim 1 : vector<16x256xf32>, i32 -> vector<16x256xf32>
    %c6_62 = arith.constant 6 : index
    %c0_63 = arith.constant 0 : index
    %100 = vector.load %arg4[%c6_62, %c0_63] : memref<9x256xf32, #tpu.memory_space<vmem>>, vector<1x256xf32>
    %101 = vector.broadcast %100 : vector<1x256xf32> to vector<16x256xf32>
    %102 = arith.mulf %99, %101 : vector<16x256xf32>
    %c96_64 = arith.constant 96 : index
    %c0_65 = arith.constant 0 : index
    %103 = vector.load %arg8[%c96_64, %c0_65] : memref<144x256xf32, #tpu.memory_space<vmem>>, vector<16x256xf32>
    tpu.vector_store %arg8[%c96_64, %c0_65], %102 {strides = array<i32>} : memref<144x256xf32, #tpu.memory_space<vmem>>, vector<16x256xf32>,
    %c240_i32_66 = arith.constant 240 : i32
    %104 = tpu.dynamic_rotate %69 by %c240_i32_66 dim 1 : vector<16x256xf32>, i32 -> vector<16x256xf32>
    %c7_67 = arith.constant 7 : index
    %c0_68 = arith.constant 0 : index
    %105 = vector.load %arg4[%c7_67, %c0_68] : memref<9x256xf32, #tpu.memory_space<vmem>>, vector<1x256xf32>
    %106 = vector.broadcast %105 : vector<1x256xf32> to vector<16x256xf32>
    %107 = arith.mulf %104, %106 : vector<16x256xf32>
    %c112_69 = arith.constant 112 : index
    %c0_70 = arith.constant 0 : index
    %108 = vector.load %arg8[%c112_69, %c0_70] : memref<144x256xf32, #tpu.memory_space<vmem>>, vector<16x256xf32>
    tpu.vector_store %arg8[%c112_69, %c0_70], %107 {strides = array<i32>} : memref<144x256xf32, #tpu.memory_space<vmem>>, vector<16x256xf32>,
    %c239_i32_71 = arith.constant 239 : i32
    %109 = tpu.dynamic_rotate %69 by %c239_i32_71 dim 1 : vector<16x256xf32>, i32 -> vector<16x256xf32>
    %c8_72 = arith.constant 8 : index
    %c0_73 = arith.constant 0 : index
    %110 = vector.load %arg4[%c8_72, %c0_73] : memref<9x256xf32, #tpu.memory_space<vmem>>, vector<1x256xf32>
    %111 = vector.broadcast %110 : vector<1x256xf32> to vector<16x256xf32>
    %112 = arith.mulf %109, %111 : vector<16x256xf32>
    %c128_74 = arith.constant 128 : index
    %c0_75 = arith.constant 0 : index
    %113 = vector.load %arg8[%c128_74, %c0_75] : memref<144x256xf32, #tpu.memory_space<vmem>>, vector<16x256xf32>
    tpu.vector_store %arg8[%c128_74, %c0_75], %112 {strides = array<i32>} : memref<144x256xf32, #tpu.memory_space<vmem>>, vector<16x256xf32>,
    %c0_76 = arith.constant 0 : index
    %c0_77 = arith.constant 0 : index
    %114 = vector.load %arg3[%c0_76, %c0_77] : memref<16x144xf32, #tpu.memory_space<vmem>>, vector<16x144xf32>
    %c0_78 = arith.constant 0 : index
    %c0_79 = arith.constant 0 : index
    %115 = vector.load %arg8[%c0_78, %c0_79] : memref<144x256xf32, #tpu.memory_space<vmem>>, vector<144x256xf32>
    %cst_80 = arith.constant dense<0.000000e+00> : vector<16x256xf32>
    %116 = tpu.matmul %114, %115, %cst_80 {dimension_numbers = #tpu.dot_dimension_numbers<[1], [0], [0], [1], [0, 0, 1, 1], [], []>} : vector<16x144xf32>, vector<144x256xf32>, vector<16x256xf32> -> vector<16x256xf32>
    %c0_81 = arith.constant 0 : index
    %c0_82 = arith.constant 0 : index
    %117 = vector.load %arg7[%c0_81, %c0_82] : memref<16x256xf32, #tpu.memory_space<vmem>>, vector<16x256xf32>
    tpu.vector_store %arg7[%c0_81, %c0_82], %116 {strides = array<i32>} : memref<16x256xf32, #tpu.memory_space<vmem>>, vector<16x256xf32>,
    %c12 = arith.constant 12 : index
    %c0_83 = arith.constant 0 : index
    %118 = vector.load %arg7[%c12, %c0_83] : memref<16x256xf32, #tpu.memory_space<vmem>>, vector<4x256xf32>
    %c0_84 = arith.constant 0 : index
    %c0_85 = arith.constant 0 : index
    %119 = vector.load %arg5[%c0_84, %c0_85] : memref<4x256xf32, #tpu.memory_space<vmem>>, vector<4x256xf32>
    %120 = arith.addf %118, %119 : vector<4x256xf32>
    %c12_86 = arith.constant 12 : index
    %c0_87 = arith.constant 0 : index
    %121 = vector.load %arg7[%c12_86, %c0_87] : memref<16x256xf32, #tpu.memory_space<vmem>>, vector<4x256xf32>
    tpu.vector_store %arg7[%c12_86, %c0_87], %120 {strides = array<i32>} : memref<16x256xf32, #tpu.memory_space<vmem>>, vector<4x256xf32>,
    %c0_88 = arith.constant 0 : index
    %c0_89 = arith.constant 0 : index
    %122 = vector.load %arg7[%c0_88, %c0_89] : memref<16x256xf32, #tpu.memory_space<vmem>>, vector<4x256xf32>
    %c0_90 = arith.constant 0 : index
    %c0_91 = arith.constant 0 : index
    %123 = vector.load %arg6[%c0_90, %c0_91] : memref<4x256xf32, #tpu.memory_space<vmem>>, vector<4x256xf32>
    %124 = arith.addf %122, %123 : vector<4x256xf32>
    %c0_92 = arith.constant 0 : index
    %c0_93 = arith.constant 0 : index
    %125 = vector.load %arg7[%c0_92, %c0_93] : memref<16x256xf32, #tpu.memory_space<vmem>>, vector<4x256xf32>
    tpu.vector_store %arg7[%c0_92, %c0_93], %124 {strides = array<i32>} : memref<16x256xf32, #tpu.memory_space<vmem>>, vector<4x256xf32>,
    %c0_94 = arith.constant 0 : index
    %c0_95 = arith.constant 0 : index
    %126 = vector.load %arg7[%c0_94, %c0_95] : memref<16x256xf32, #tpu.memory_space<vmem>>, vector<4x256xf32>
    %cst_96 = arith.constant 0.707106769 : f32
    %127 = vector.broadcast %cst_96 : f32 to vector<4x256xf32>
    %128 = arith.mulf %127, %126 : vector<4x256xf32>
    %c0_97 = arith.constant 0 : index
    %c0_98 = arith.constant 0 : index
    %129 = vector.load %arg7[%c0_97, %c0_98] : memref<16x256xf32, #tpu.memory_space<vmem>>, vector<4x256xf32>
    tpu.vector_store %arg7[%c0_97, %c0_98], %128 {strides = array<i32>} : memref<16x256xf32, #tpu.memory_space<vmem>>, vector<4x256xf32>,
    %c0_99 = arith.constant 0 : index
    %c0_100 = arith.constant 0 : index
    %130 = vector.load %arg7[%c0_99, %c0_100] : memref<16x256xf32, #tpu.memory_space<vmem>>, vector<4x256xf32>
    %cst_101 = arith.constant 0.707106769 : f32
    %131 = vector.broadcast %cst_101 : f32 to vector<4x256xf32>
    %132 = arith.mulf %131, %130 : vector<4x256xf32>
    %c4_102 = arith.constant 4 : index
    %c0_103 = arith.constant 0 : index
    %133 = vector.load %arg7[%c4_102, %c0_103] : memref<16x256xf32, #tpu.memory_space<vmem>>, vector<4x256xf32>
    %134 = arith.addf %132, %133 : vector<4x256xf32>
    %cst_104 = arith.constant 0.816496611 : f32
    %135 = vector.broadcast %cst_104 : f32 to vector<4x256xf32>
    %136 = arith.mulf %135, %134 : vector<4x256xf32>
    %c4_105 = arith.constant 4 : index
    %c0_106 = arith.constant 0 : index
    %137 = vector.load %arg7[%c4_105, %c0_106] : memref<16x256xf32, #tpu.memory_space<vmem>>, vector<4x256xf32>
    tpu.vector_store %arg7[%c4_105, %c0_106], %136 {strides = array<i32>} : memref<16x256xf32, #tpu.memory_space<vmem>>, vector<4x256xf32>,
    %c4_107 = arith.constant 4 : index
    %c0_108 = arith.constant 0 : index
    %138 = vector.load %arg7[%c4_107, %c0_108] : memref<16x256xf32, #tpu.memory_space<vmem>>, vector<4x256xf32>
    %cst_109 = arith.constant 0.816496611 : f32
    %139 = vector.broadcast %cst_109 : f32 to vector<4x256xf32>
    %140 = arith.mulf %139, %138 : vector<4x256xf32>
    %c8_110 = arith.constant 8 : index
    %c0_111 = arith.constant 0 : index
    %141 = vector.load %arg7[%c8_110, %c0_111] : memref<16x256xf32, #tpu.memory_space<vmem>>, vector<4x256xf32>
    %142 = arith.addf %140, %141 : vector<4x256xf32>
    %cst_112 = arith.constant 0.866025388 : f32
    %143 = vector.broadcast %cst_112 : f32 to vector<4x256xf32>
    %144 = arith.mulf %143, %142 : vector<4x256xf32>
    %c8_113 = arith.constant 8 : index
    %c0_114 = arith.constant 0 : index
    %145 = vector.load %arg7[%c8_113, %c0_114] : memref<16x256xf32, #tpu.memory_space<vmem>>, vector<4x256xf32>
    tpu.vector_store %arg7[%c8_113, %c0_114], %144 {strides = array<i32>} : memref<16x256xf32, #tpu.memory_space<vmem>>, vector<4x256xf32>,
    %c8_115 = arith.constant 8 : index
    %c0_116 = arith.constant 0 : index
    %146 = vector.load %arg7[%c8_115, %c0_116] : memref<16x256xf32, #tpu.memory_space<vmem>>, vector<4x256xf32>
    %cst_117 = arith.constant 0.866025388 : f32
    %147 = vector.broadcast %cst_117 : f32 to vector<4x256xf32>
    %148 = arith.mulf %147, %146 : vector<4x256xf32>
    %c12_118 = arith.constant 12 : index
    %c0_119 = arith.constant 0 : index
    %149 = vector.load %arg7[%c12_118, %c0_119] : memref<16x256xf32, #tpu.memory_space<vmem>>, vector<4x256xf32>
    %150 = arith.addf %148, %149 : vector<4x256xf32>
    %cst_120 = arith.constant 0.89442718 : f32
    %151 = vector.broadcast %cst_120 : f32 to vector<4x256xf32>
    %152 = arith.mulf %151, %150 : vector<4x256xf32>
    %c12_121 = arith.constant 12 : index
    %c0_122 = arith.constant 0 : index
    %153 = vector.load %arg7[%c12_121, %c0_122] : memref<16x256xf32, #tpu.memory_space<vmem>>, vector<4x256xf32>
    tpu.vector_store %arg7[%c12_121, %c0_122], %152 {strides = array<i32>} : memref<16x256xf32, #tpu.memory_space<vmem>>, vector<4x256xf32>,
    %c12_123 = arith.constant 12 : index
    %c0_124 = arith.constant 0 : index
    %154 = vector.load %arg7[%c12_123, %c0_124] : memref<16x256xf32, #tpu.memory_space<vmem>>, vector<4x256xf32>
    %cst_125 = arith.constant 0.89442718 : f32
    %155 = vector.broadcast %cst_125 : f32 to vector<4x256xf32>
    %156 = arith.mulf %155, %154 : vector<4x256xf32>
    %c12_126 = arith.constant 12 : index
    %c0_127 = arith.constant 0 : index
    %157 = vector.load %arg7[%c12_126, %c0_127] : memref<16x256xf32, #tpu.memory_space<vmem>>, vector<4x256xf32>
    tpu.vector_store %arg7[%c12_126, %c0_127], %156 {strides = array<i32>} : memref<16x256xf32, #tpu.memory_space<vmem>>, vector<4x256xf32>,
    %c12_128 = arith.constant 12 : index
    %c0_129 = arith.constant 0 : index
    %158 = vector.load %arg7[%c12_128, %c0_129] : memref<16x256xf32, #tpu.memory_space<vmem>>, vector<4x256xf32>
    %cst_130 = arith.constant 0.866025388 : f32
    %159 = vector.broadcast %cst_130 : f32 to vector<4x256xf32>
    %160 = arith.mulf %159, %158 : vector<4x256xf32>
    %c8_131 = arith.constant 8 : index
    %c0_132 = arith.constant 0 : index
    %161 = vector.load %arg7[%c8_131, %c0_132] : memref<16x256xf32, #tpu.memory_space<vmem>>, vector<4x256xf32>
    %162 = arith.addf %160, %161 : vector<4x256xf32>
    %cst_133 = arith.constant 0.866025388 : f32
    %163 = vector.broadcast %cst_133 : f32 to vector<4x256xf32>
    %164 = arith.mulf %163, %162 : vector<4x256xf32>
    %c8_134 = arith.constant 8 : index
    %c0_135 = arith.constant 0 : index
    %165 = vector.load %arg7[%c8_134, %c0_135] : memref<16x256xf32, #tpu.memory_space<vmem>>, vector<4x256xf32>
    tpu.vector_store %arg7[%c8_134, %c0_135], %164 {strides = array<i32>} : memref<16x256xf32, #tpu.memory_space<vmem>>, vector<4x256xf32>,
    %c8_136 = arith.constant 8 : index
    %c0_137 = arith.constant 0 : index
    %166 = vector.load %arg7[%c8_136, %c0_137] : memref<16x256xf32, #tpu.memory_space<vmem>>, vector<4x256xf32>
    %cst_138 = arith.constant 0.816496611 : f32
    %167 = vector.broadcast %cst_138 : f32 to vector<4x256xf32>
    %168 = arith.mulf %167, %166 : vector<4x256xf32>
    %c4_139 = arith.constant 4 : index
    %c0_140 = arith.constant 0 : index
    %169 = vector.load %arg7[%c4_139, %c0_140] : memref<16x256xf32, #tpu.memory_space<vmem>>, vector<4x256xf32>
    %170 = arith.addf %168, %169 : vector<4x256xf32>
    %cst_141 = arith.constant 0.816496611 : f32
    %171 = vector.broadcast %cst_141 : f32 to vector<4x256xf32>
    %172 = arith.mulf %171, %170 : vector<4x256xf32>
    %c4_142 = arith.constant 4 : index
    %c0_143 = arith.constant 0 : index
    %173 = vector.load %arg7[%c4_142, %c0_143] : memref<16x256xf32, #tpu.memory_space<vmem>>, vector<4x256xf32>
    tpu.vector_store %arg7[%c4_142, %c0_143], %172 {strides = array<i32>} : memref<16x256xf32, #tpu.memory_space<vmem>>, vector<4x256xf32>,
    %c4_144 = arith.constant 4 : index
    %c0_145 = arith.constant 0 : index
    %174 = vector.load %arg7[%c4_144, %c0_145] : memref<16x256xf32, #tpu.memory_space<vmem>>, vector<4x256xf32>
    %cst_146 = arith.constant 0.707106769 : f32
    %175 = vector.broadcast %cst_146 : f32 to vector<4x256xf32>
    %176 = arith.mulf %175, %174 : vector<4x256xf32>
    %c0_147 = arith.constant 0 : index
    %c0_148 = arith.constant 0 : index
    %177 = vector.load %arg7[%c0_147, %c0_148] : memref<16x256xf32, #tpu.memory_space<vmem>>, vector<4x256xf32>
    %178 = arith.addf %176, %177 : vector<4x256xf32>
    %cst_149 = arith.constant 0.707106769 : f32
    %179 = vector.broadcast %cst_149 : f32 to vector<4x256xf32>
    %180 = arith.mulf %179, %178 : vector<4x256xf32>
    %c0_150 = arith.constant 0 : index
    %c0_151 = arith.constant 0 : index
    %181 = vector.load %arg7[%c0_150, %c0_151] : memref<16x256xf32, #tpu.memory_space<vmem>>, vector<4x256xf32>
    tpu.vector_store %arg7[%c0_150, %c0_151], %180 {strides = array<i32>} : memref<16x256xf32, #tpu.memory_space<vmem>>, vector<4x256xf32>,
    return
  }
  func.func @transform_0(%arg0: i32, %arg1: i32) -> (i32, i32) {
    %c0_i32 = arith.constant 0 : i32
    %c0_i32_0 = arith.constant 0 : i32
    %c0_i32_1 = arith.constant 0 : i32
    return %c0_i32, %c0_i32_0 : i32, i32
  }
  func.func @transform_1(%arg0: i32, %arg1: i32) -> (i32, i32) {
    %c0_i32 = arith.constant 0 : i32
    %c0_i32_0 = arith.constant 0 : i32
    %c0_i32_1 = arith.constant 0 : i32
    return %c0_i32, %c0_i32_0 : i32, i32
  }
  func.func @transform_2(%arg0: i32, %arg1: i32) -> (i32, i32) {
    %c0_i32 = arith.constant 0 : i32
    %c0_i32_0 = arith.constant 0 : i32
    %c0_i32_1 = arith.constant 0 : i32
    return %c0_i32, %c0_i32_0 : i32, i32
  }
  func.func @transform_3(%arg0: i32, %arg1: i32) -> (i32, i32) {
    %c0_i32 = arith.constant 0 : i32
    %c0_i32_0 = arith.constant 0 : i32
    return %c0_i32, %arg0 : i32, i32
  }
  func.func @transform_4(%arg0: i32, %arg1: i32) -> (i32, i32) {
    %c0_i32 = arith.constant 0 : i32
    %c0_i32_0 = arith.constant 0 : i32
    %c0_i32_1 = arith.constant 0 : i32
    return %c0_i32, %c0_i32_0 : i32, i32
  }
  func.func @transform_5(%arg0: i32, %arg1: i32) -> (i32, i32) {
    %c0_i32 = arith.constant 0 : i32
    %c0_i32_0 = arith.constant 0 : i32
    return %c0_i32, %arg0 : i32, i32
  }
}

</mosaic_0001>

<llo_original>
// kernel: least_action_forward.1
$region0: #{least_action_forward.1}
  #allocation0 [shape = 'u32[]', space=smem, size = 0x4, offset = 0x4, fixed_abs, tag = 'smem constant byte address 0x4 - core index']
  #allocation1 [shape = 'u32[144,128]{1,0:T(1,128)}', space=vmem, size = 0x12000, scoped, tag = 'internal scratch']
  #allocation2 [shape = 'f32[144,256]{1,0:T(8,128)}', space=vmem, size = 0x24000, scoped, tag = 'scratch operand']
  %s0 = inlined_call_operand.vmem [shape: f32[16,144], index: 0, kind: input, shape index: {}]
  %s1 = inlined_call_operand.vmem [shape: f32[16,144], index: 1, kind: input, shape index: {}]
  %s2 = inlined_call_operand.vmem [shape: f32[9,256], index: 2, kind: input, shape index: {}]
  %s3 = inlined_call_operand.vmem [shape: f32[4,512], index: 3, kind: input, shape index: {}]
  %s4 = inlined_call_operand.vmem [shape: f32[4,256], index: 4, kind: input, shape index: {}]
  %s5 = inlined_call_operand.vmem [shape: f32[16,512], index: 5, kind: output, shape index: {}]
  %s6 = sld [smem:[#allocation0]]
  $region76: #{least_action_forward.1} parent=0
    _
  %s8 = ssub.s32 1, %s6
  %s9 = scalar_select 0, %s8, %s6
  $region1: #{least_action_forward.1} parent=0
    #allocation3 [shape = 'u8[32768]{0}', space=vmem, size = 0x8000, scoped, tag = 'output window, operand 0']
    loop: start=0, step=1, limit=6
    $region2: #{least_action_forward.1} parent=1 // loop_pre_header
      _
    $region3: #{least_action_forward.1} parent=1 // loop_header
      %s11 = sphi 0, %s15
      %p12 = scmp.ge.s32.totalorder %s11, 6
      %s18 = sphi 0, %s30
      %s19 = sphi 0, %s26
      %s20 = sphi 0, %s18
      %s21 = sphi 0, %s19
      %s22 = sphi 0, %s20
      %s23 = sphi 0, %s21
      %s31 = sphi 0, %s31
      %s33 = sphi 0, %s31
      %s34 = sphi 0, %s33
      %s48 = sphi 0, %s34
      %s52 = sphi 0, %s52
      %s54 = sphi 0, %s52
      %s55 = sphi 0, %s54
      %s69 = sphi 0, %s55
      %s73 = sphi 0, %s73
      %s75 = sphi 0, %s73
      %s76 = sphi 0, %s75
      %s90 = sphi 0, %s76
      %s96 = sphi 0, %s98
      %s99 = sphi 0, %s96
      %s100 = sphi 0, %s99
      %s116 = sphi 0, %s100
      %s120 = sphi 0, %s120
      %s122 = sphi 0, %s120
      %s123 = sphi 0, %s122
      %s137 = sphi 0, %s123
      %s143 = sphi 0, %s145
      %s146 = sphi 0, %s143
      %s147 = sphi 0, %s146
      %s163 = sphi 0, %s147
    $region4: #{least_action_forward.1} parent=1 // loop_header_branch
      %14 = sbr.rel (%p12) target = $region8
    $region5: #{least_action_forward.1} parent=1 // loop_body
      %s16 = ssub.s32 %s11, 1
      %s17 = ssub.s32 %s11, 2
      %s24 = sadd.s32 1, %s19
      %p25 = scmp.ge.s32.totalorder %s24, 2
      %s26 = scalar_select %p25, 0, %s24
      %s27 = sadd.s32 1, %s18
      %s28 = scalar_select %p25, %s27, %s18
      %p29 = scmp.ge.s32.totalorder %s28, 2
      %s30 = scalar_select %p29, 0, %s28
      %s32 = sadd.s32 %s31, 1
      %p35 = scmp.eq.s32.totalorder %s11, 3
      %p36 = scmp.ne.s32.totalorder %s31, %s33
      %p37 = scmp.eq.s32.totalorder %s11, 0
      %p38 = por %p36, %p37
      %p39 = scmp.ne.s32.totalorder %s31, %s33
      %p40 = scmp.eq.s32.totalorder %s16, 3
      %p41 = por %p39, %p40
      %p42 = scmp.ne.s32.totalorder %s33, %s34
      %p43 = scmp.eq.s32.totalorder %s16, 0
      %p44 = por %p42, %p43
      %p45 = scmp.ne.s32.totalorder %s33, %s34
      %p46 = scmp.eq.s32.totalorder %s17, 3
      %p47 = por %p45, %p46
      %p49 = scmp.ne.s32.totalorder %s34, %s48
      %p50 = scmp.eq.s32.totalorder %s17, 0
      %p51 = por %p49, %p50
      %s53 = sadd.s32 %s52, 1
      %p56 = scmp.eq.s32.totalorder %s11, 3
      %p57 = scmp.ne.s32.totalorder %s52, %s54
      %p58 = scmp.eq.s32.totalorder %s11, 0
      %p59 = por %p57, %p58
      %p60 = scmp.ne.s32.totalorder %s52, %s54
      %p61 = scmp.eq.s32.totalorder %s16, 3
      %p62 = por %p60, %p61
      %p63 = scmp.ne.s32.totalorder %s54, %s55
      %p64 = scmp.eq.s32.totalorder %s16, 0
      %p65 = por %p63, %p64
      %p66 = scmp.ne.s32.totalorder %s54, %s55
      %p67 = scmp.eq.s32.totalorder %s17, 3
      %p68 = por %p66, %p67
      %p70 = scmp.ne.s32.totalorder %s55, %s69
      %p71 = scmp.eq.s32.totalorder %s17, 0
      %p72 = por %p70, %p71
      %s74 = sadd.s32 %s73, 1
      %p77 = scmp.eq.s32.totalorder %s11, 3
      %p78 = scmp.ne.s32.totalorder %s73, %s75
      %p79 = scmp.eq.s32.totalorder %s11, 0
      %p80 = por %p78, %p79
      %p81 = scmp.ne.s32.totalorder %s73, %s75
      %p82 = scmp.eq.s32.totalorder %s16, 3
      %p83 = por %p81, %p82
      %p84 = scmp.ne.s32.totalorder %s75, %s76
      %p85 = scmp.eq.s32.totalorder %s16, 0
      %p86 = por %p84, %p85
      %p87 = scmp.ne.s32.totalorder %s75, %s76
      %p88 = scmp.eq.s32.totalorder %s17, 3
      %p89 = por %p87, %p88
      %p91 = scmp.ne.s32.totalorder %s76, %s90
      %p92 = scmp.eq.s32.totalorder %s17, 0
      %p93 = por %p91, %p92
      %s94 = ssub.s32 %s18, %s30
      %p95 = scmp.eq.s32.totalorder %s94, 0
      %s97 = sadd.s32 %s96, 1
      %s98 = scalar_select %p95, %s96, %s97
      %p101 = pneg %p95
      %p102 = scmp.eq.s32.totalorder %s11, 3
      %p103 = por %p101, %p102
      %p104 = scmp.ne.s32.totalorder %s96, %s99
      %p105 = scmp.eq.s32.totalorder %s11, 0
      %p106 = por %p104, %p105
      %p107 = scmp.ne.s32.totalorder %s96, %s99
      %p108 = scmp.eq.s32.totalorder %s16, 3
      %p109 = por %p107, %p108
      %p110 = scmp.ne.s32.totalorder %s99, %s100
      %p111 = scmp.eq.s32.totalorder %s16, 0
      %p112 = por %p110, %p111
      %p113 = scmp.ne.s32.totalorder %s99, %s100
      %p114 = scmp.eq.s32.totalorder %s17, 3
      %p115 = por %p113, %p114
      %p117 = scmp.ne.s32.totalorder %s100, %s116
      %p118 = scmp.eq.s32.totalorder %s17, 0
      %p119 = por %p117, %p118
      %s121 = sadd.s32 %s120, 1
      %p124 = scmp.eq.s32.totalorder %s11, 3
      %p125 = scmp.ne.s32.totalorder %s120, %s122
      %p126 = scmp.eq.s32.totalorder %s11, 0
      %p127 = por %p125, %p126
      %p128 = scmp.ne.s32.totalorder %s120, %s122
      %p129 = scmp.eq.s32.totalorder %s16, 3
      %p130 = por %p128, %p129
      %p131 = scmp.ne.s32.totalorder %s122, %s123
      %p132 = scmp.eq.s32.totalorder %s16, 0
      %p133 = por %p131, %p132
      %p134 = scmp.ne.s32.totalorder %s122, %s123
      %p135 = scmp.eq.s32.totalorder %s17, 3
      %p136 = por %p134, %p135
      %p138 = scmp.ne.s32.totalorder %s123, %s137
      %p139 = scmp.eq.s32.totalorder %s17, 0
      %p140 = por %p138, %p139
      %s141 = ssub.s32 %s18, %s30
      %p142 = scmp.eq.s32.totalorder %s141, 0
      %s144 = sadd.s32 %s143, 1
      %s145 = scalar_select %p142, %s143, %s144
      %p148 = pneg %p142
      %p149 = scmp.eq.s32.totalorder %s11, 3
      %p150 = por %p148, %p149
      %p151 = scmp.ne.s32.totalorder %s143, %s146
      %p152 = scmp.eq.s32.totalorder %s11, 0
      %p153 = por %p151, %p152
      %p154 = scmp.ne.s32.totalorder %s143, %s146
      %p155 = scmp.eq.s32.totalorder %s16, 3
      %p156 = por %p154, %p155
      %p157 = scmp.ne.s32.totalorder %s146, %s147
      %p158 = scmp.eq.s32.totalorder %s16, 0
      %p159 = por %p157, %p158
      %p160 = scmp.ne.s32.totalorder %s146, %s147
      %p161 = scmp.eq.s32.totalorder %s17, 3
      %p162 = por %p160, %p161
      %p164 = scmp.ne.s32.totalorder %s147, %s163
      %p165 = scmp.eq.s32.totalorder %s17, 0
      %p166 = por %p164, %p165
      %p167 = scmp.le.s32.totalorder 1, %s11
      %p168 = scmp.lt.s32.totalorder %s11, 5
      %p169 = pnand %p167, %p168
      %p170 = pneg %p169
      // Predicated region
      $region9: #{least_action_forward.1} parent=5 // pred_check
        _
      $region10: #{least_action_forward.1} parent=5 // pred_check_branch
        %172 = sbr.rel (%p169) target = $region12
      $region11: #{least_action_forward.1} parent=5 // pred_region
        %s173 = ssub.s32 %s11, 1
        // Predicated region
        $region13: #{least_action_forward.1} parent=11 // pred_check
          %p174 = pneg %p44
        $region14: #{least_action_forward.1} parent=11 // pred_check_branch
          %176 = sbr.rel (%p174) target = $region16
        $region15: #{least_action_forward.1} parent=11 // pred_region
          _
        $region16: #{least_action_forward.1} parent=11 // pred_fallthru
          _
        // Predicated region
        $region17: #{least_action_forward.1} parent=11 // pred_check
          %p177 = pneg %p65
        $region18: #{least_action_forward.1} parent=11 // pred_check_branch
          %179 = sbr.rel (%p177) target = $region20
        $region19: #{least_action_forward.1} parent=11 // pred_region
          _
        $region20: #{least_action_forward.1} parent=11 // pred_fallthru
          _
        // Predicated region
        $region21: #{least_action_forward.1} parent=11 // pred_check
          %p180 = pneg %p86
        $region22: #{least_action_forward.1} parent=11 // pred_check_branch
          %182 = sbr.rel (%p180) target = $region24
        $region23: #{least_action_forward.1} parent=11 // pred_region
          _
        $region24: #{least_action_forward.1} parent=11 // pred_fallthru
          _
        // Predicated region
        $region25: #{least_action_forward.1} parent=11 // pred_check
          %p183 = pneg %p133
        $region26: #{least_action_forward.1} parent=11 // pred_check_branch
          %185 = sbr.rel (%p183) target = $region28
        $region27: #{least_action_forward.1} parent=11 // pred_region
          _
        $region28: #{least_action_forward.1} parent=11 // pred_fallthru
          _
      $region12: #{least_action_forward.1} parent=5 // pred_fallthru
        _
      %p186 = scmp.lt.s32.totalorder %s11, 4
      // Predicated region
      $region29: #{least_action_forward.1} parent=5 // pred_check
        %p187 = pneg %p186
      $region30: #{least_action_forward.1} parent=5 // pred_check_branch
        %189 = sbr.rel (%p187) target = $region32
      $region31: #{least_action_forward.1} parent=5 // pred_region
        // Predicated region
        $region33: #{least_action_forward.1} parent=31 // pred_check
          %p190 = pneg %p106
        $region34: #{least_action_forward.1} parent=31 // pred_check_branch
          %192 = sbr.rel (%p190) target = $region36
        $region35: #{least_action_forward.1} parent=31 // pred_region
          %s193 = smul.u32 2, %s18
          %p194 = scmp.lt.s32.totalorder %s193, 3
          %s195 = scalar_select %p194, %s193, 3
          %s196 = smul.addr %s195, 4
          %s197 = scalar_lea.vmem %s3, %s196
          %s198 = smul.u32 2, %s18
        $region36: #{least_action_forward.1} parent=31 // pred_fallthru
          _
      $region32: #{least_action_forward.1} parent=5 // pred_fallthru
        _
      %p199 = scmp.le.s32.totalorder 1, %s11
      %p200 = scmp.lt.s32.totalorder %s11, 5
      %p201 = pnand %p199, %p200
      %p202 = pneg %p201
      // Predicated region
      $region37: #{least_action_forward.1} parent=5 // pred_check
        _
      $region38: #{least_action_forward.1} parent=5 // pred_check_branch
        %204 = sbr.rel (%p201) target = $region40
      $region39: #{least_action_forward.1} parent=5 // pred_region
        %s205 = ssub.s32 %s11, 1
        %p206 = pneg %p44
        %p207 = pneg %p41
        %p208 = pneg %p65
        %p209 = pneg %p62
        %p210 = pneg %p86
        %p211 = pneg %p83
        %s212 = smul.u32 2, %s20
        %p213 = scmp.lt.s32.totalorder %s212, 3
        %s214 = scalar_select %p213, %s212, 3
        %s215 = smul.addr %s214, 4
        %s216 = scalar_lea.vmem %s3, %s215
        %p217 = pneg %p112
        %p218 = pneg %p109
        %p219 = pneg %p133
        %p220 = pneg %p130
        %p221 = pneg %p159
        %p222 = pneg %p156
        %s223 = sand.u32 %s146, 1
        %s224 = sand.u32 %s146, 1
        %s225 = smul.addr %s224, 32
        %s226 = scalar_lea.vmem [#allocation3], %s225
        %s227 = smul.u32 2, %s20
        %p228 = scmp.lt.s32.totalorder %s227, 3
        %s229 = scalar_select %p228, %s227, 3
        %s230 = smul.addr %s229, 4
        %s231 = scalar_lea.vmem %s3, %s230
        %s232 = smul.u32 2, %s20
        %s233 = smul.u32 2, %s20
        %p234 = scmp.eq.s32.totalorder %s21, 0
        // Predicated region
        $region41: #{least_action_forward.1} parent=39 // pred_check
          %p235 = pneg %p234
        $region42: #{least_action_forward.1} parent=39 // pred_check_branch
          %237 = sbr.rel (%p235) target = $region44
        $region43: #{least_action_forward.1} parent=39 // pred_region
          %238 = vst [vmem:[%s226] sm:$0xff] 0.0
          %239 = vst [vmem:[%s226 + $0x8] sm:$0xff] 0.0
          %240 = vst [vmem:[%s226 + $0x10] sm:$0xff] 0.0
          %241 = vst [vmem:[%s226 + $0x18] sm:$0xff] 0.0
        $region44: #{least_action_forward.1} parent=39 // pred_fallthru
          _
        %v242 = vld [vmem:[%s226] sm:$0xff]
        %v243 = vld [vmem:[%s226 + $0x8] sm:$0xff]
        %v244 = vld [vmem:[%s226 + $0x10] sm:$0xff]
        %v245 = vld [vmem:[%s226 + $0x18] sm:$0xff]
        %246 = vrot.lane.b32.xlu0 %v242, 17
        %v247 = vpop.permute.xlu0 %246
        %248 = vrot.lane.b32.xlu0 %v244, 17
        %v249 = vpop.permute.xlu0 %248
        %250 = vrot.lane.b32.xlu0 %v243, 17
        %v251 = vpop.permute.xlu0 %250
        %252 = vrot.lane.b32.xlu0 %v245, 17
        %v253 = vpop.permute.xlu0 %252
        %v254 = vlaneseq
        %v255 = vand.u32 %v254, 127
        %vm256 = vcmp.lt.s32.totalorder %v255, 17
        %v257 = vsel %vm256, %v247, %v251
        %v258 = vsel %vm256, %v249, %v253
        %v259 = vsel %vm256, %v251, %v247
        %v260 = vsel %vm256, %v253, %v249
        %v261 = vld [vmem:[%s2] ss:$8 sm:$0x3]
        %v263 = vlaneseq
        %v264 = vshrl.u32 %v263, 7
        %v265 = vsub.s32 0, %v264
        %v266 = vrot.slane %v261, %v265
        %v267 = vlaneseq
        %v268 = vshrl.u32 %v267, 7
        %v269 = vsub.s32 1, %v268
        %v270 = vrot.slane %v261, %v269
        %v273 = vmul.f32 %v259, %v266
        %v274 = vmul.f32 %v257, %v270
        %v275 = vmul.f32 %v260, %v266
        %v276 = vmul.f32 %v258, %v270
        %277 = vst [vmem:[#allocation2] sm:$0xff] %v273
        %278 = vst [vmem:[#allocation2 + $0x8] sm:$0xff] %v274
        %279 = vst [vmem:[#allocation2 + $0x10] sm:$0xff] %v275
        %280 = vst [vmem:[#allocation2 + $0x18] sm:$0xff] %v276
        %281 = vrot.lane.b32.xlu0 %v242, 16
        %v282 = vpop.permute.xlu0 %281
        %283 = vrot.lane.b32.xlu0 %v244, 16
        %v284 = vpop.permute.xlu0 %283
        %285 = vrot.lane.b32.xlu0 %v243, 16
        %v286 = vpop.permute.xlu0 %285
        %287 = vrot.lane.b32.xlu0 %v245, 16
        %v288 = vpop.permute.xlu0 %287
        %vm289 = vcmp.lt.s32.totalorder %v255, 16
        %v290 = vsel %vm289, %v282, %v286
        %v291 = vsel %vm289, %v284, %v288
        %v292 = vsel %vm289, %v286, %v282
        %v293 = vsel %vm289, %v288, %v284
        %s294 = scalar_lea.vmem %s2, 1
        %v295 = vld [vmem:[%s294] ss:$8 sm:$0x3]
        %v297 = vlaneseq
        %v298 = vshrl.u32 %v297, 7
        %v299 = vsub.s32 0, %v298
        %v300 = vrot.slane %v295, %v299
        %v301 = vlaneseq
        %v302 = vshrl.u32 %v301, 7
        %v303 = vsub.s32 1, %v302
        %v304 = vrot.slane %v295, %v303
        %v307 = vmul.f32 %v292, %v300
        %v308 = vmul.f32 %v290, %v304
        %v309 = vmul.f32 %v293, %v300
        %v310 = vmul.f32 %v291, %v304
        %311 = vst [vmem:[#allocation2 + $0x20] sm:$0xff] %v307
        %312 = vst [vmem:[#allocation2 + $0x28] sm:$0xff] %v308
        %313 = vst [vmem:[#allocation2 + $0x30] sm:$0xff] %v309
        %314 = vst [vmem:[#allocation2 + $0x38] sm:$0xff] %v310
        %315 = vrot.lane.b32.xlu0 %v242, 15
        %v316 = vpop.permute.xlu0 %315
        %317 = vrot.lane.b32.xlu0 %v244, 15
        %v318 = vpop.permute.xlu0 %317
        %319 = vrot.lane.b32.xlu0 %v243, 15
        %v320 = vpop.permute.xlu0 %319
        %321 = vrot.lane.b32.xlu0 %v245, 15
        %v322 = vpop.permute.xlu0 %321
        %vm323 = vcmp.lt.s32.totalorder %v255, 15
        %v324 = vsel %vm323, %v316, %v320
        %v325 = vsel %vm323, %v318, %v322
        %v326 = vsel %vm323, %v320, %v316
        %v327 = vsel %vm323, %v322, %v318
        %s328 = scalar_lea.vmem %s2, 2
        %v329 = vld [vmem:[%s328] ss:$8 sm:$0x3]
        %v331 = vlaneseq
        %v332 = vshrl.u32 %v331, 7
        %v333 = vsub.s32 0, %v332
        %v334 = vrot.slane %v329, %v333
        %v335 = vlaneseq
        %v336 = vshrl.u32 %v335, 7
        %v337 = vsub.s32 1, %v336
        %v338 = vrot.slane %v329, %v337
        %v341 = vmul.f32 %v326, %v334
        %v342 = vmul.f32 %v324, %v338
        %v343 = vmul.f32 %v327, %v334
        %v344 = vmul.f32 %v325, %v338
        %345 = vst [vmem:[#allocation2 + $0x40] sm:$0xff] %v341
        %346 = vst [vmem:[#allocation2 + $0x48] sm:$0xff] %v342
        %347 = vst [vmem:[#allocation2 + $0x50] sm:$0xff] %v343
        %348 = vst [vmem:[#allocation2 + $0x58] sm:$0xff] %v344
        %349 = vrot.lane.b32.xlu0 %v242, 1
        %v350 = vpop.permute.xlu0 %349
        %351 = vrot.lane.b32.xlu0 %v244, 1
        %v352 = vpop.permute.xlu0 %351
        %353 = vrot.lane.b32.xlu0 %v243, 1
        %v354 = vpop.permute.xlu0 %353
        %355 = vrot.lane.b32.xlu0 %v245, 1
        %v356 = vpop.permute.xlu0 %355
        %vm357 = vcmp.lt.s32.totalorder %v255, 1
        %v358 = vsel %vm357, %v350, %v354
        %v359 = vsel %vm357, %v352, %v356
        %v360 = vsel %vm357, %v354, %v350
        %v361 = vsel %vm357, %v356, %v352
        %s362 = scalar_lea.vmem %s2, 3
        %v363 = vld [vmem:[%s362] ss:$8 sm:$0x3]
        %v365 = vlaneseq
        %v366 = vshrl.u32 %v365, 7
        %v367 = vsub.s32 0, %v366
        %v368 = vrot.slane %v363, %v367
        %v369 = vlaneseq
        %v370 = vshrl.u32 %v369, 7
        %v371 = vsub.s32 1, %v370
        %v372 = vrot.slane %v363, %v371
        %v375 = vmul.f32 %v360, %v368
        %v376 = vmul.f32 %v358, %v372
        %v377 = vmul.f32 %v361, %v368
        %v378 = vmul.f32 %v359, %v372
        %379 = vst [vmem:[#allocation2 + $0x60] sm:$0xff] %v375
        %380 = vst [vmem:[#allocation2 + $0x68] sm:$0xff] %v376
        %381 = vst [vmem:[#allocation2 + $0x70] sm:$0xff] %v377
        %382 = vst [vmem:[#allocation2 + $0x78] sm:$0xff] %v378
        %s383 = scalar_lea.vmem %s2, 4
        %v384 = vld [vmem:[%s383] ss:$8 sm:$0x3]
        %v386 = vlaneseq
        %v387 = vshrl.u32 %v386, 7
        %v388 = vsub.s32 0, %v387
        %v389 = vrot.slane %v384, %v388
        %v390 = vlaneseq
        %v391 = vshrl.u32 %v390, 7
        %v392 = vsub.s32 1, %v391
        %v393 = vrot.slane %v384, %v392
        %v396 = vmul.f32 %v242, %v389
        %v397 = vmul.f32 %v243, %v393
        %v398 = vmul.f32 %v244, %v389
        %v399 = vmul.f32 %v245, %v393
        %400 = vst [vmem:[#allocation2 + $0x80] sm:$0xff] %v396
        %401 = vst [vmem:[#allocation2 + $0x88] sm:$0xff] %v397
        %402 = vst [vmem:[#allocation2 + $0x90] sm:$0xff] %v398
        %403 = vst [vmem:[#allocation2 + $0x98] sm:$0xff] %v399
        %404 = vrot.lane.b32.xlu0 %v242, 127
        %v405 = vpop.permute.xlu0 %404
        %406 = vrot.lane.b32.xlu0 %v244, 127
        %v407 = vpop.permute.xlu0 %406
        %408 = vrot.lane.b32.xlu0 %v243, 127
        %v409 = vpop.permute.xlu0 %408
        %410 = vrot.lane.b32.xlu0 %v245, 127
        %v411 = vpop.permute.xlu0 %410
        %vm412 = vcmp.lt.s32.totalorder %v255, 127
        %v413 = vsel %vm412, %v405, %v409
        %v414 = vsel %vm412, %v407, %v411
        %v415 = vsel %vm412, %v409, %v405
        %v416 = vsel %vm412, %v411, %v407
        %s417 = scalar_lea.vmem %s2, 5
        %v418 = vld [vmem:[%s417] ss:$8 sm:$0x3]
        %v420 = vlaneseq
        %v421 = vshrl.u32 %v420, 7
        %v422 = vsub.s32 0, %v421
        %v423 = vrot.slane %v418, %v422
        %v424 = vlaneseq
        %v425 = vshrl.u32 %v424, 7
        %v426 = vsub.s32 1, %v425
        %v427 = vrot.slane %v418, %v426
        %v430 = vmul.f32 %v413, %v423
        %v431 = vmul.f32 %v415, %v427
        %v432 = vmul.f32 %v414, %v423
        %v433 = vmul.f32 %v416, %v427
        %434 = vst [vmem:[#allocation2 + $0xa0] sm:$0xff] %v430
        %435 = vst [vmem:[#allocation2 + $0xa8] sm:$0xff] %v431
        %436 = vst [vmem:[#allocation2 + $0xb0] sm:$0xff] %v432
        %437 = vst [vmem:[#allocation2 + $0xb8] sm:$0xff] %v433
        %438 = vrot.lane.b32.xlu0 %v242, 113
        %v439 = vpop.permute.xlu0 %438
        %440 = vrot.lane.b32.xlu0 %v244, 113
        %v441 = vpop.permute.xlu0 %440
        %442 = vrot.lane.b32.xlu0 %v243, 113
        %v443 = vpop.permute.xlu0 %442
        %444 = vrot.lane.b32.xlu0 %v245, 113
        %v445 = vpop.permute.xlu0 %444
        %vm446 = vcmp.lt.s32.totalorder %v255, 113
        %v447 = vsel %vm446, %v439, %v443
        %v448 = vsel %vm446, %v441, %v445
        %v449 = vsel %vm446, %v443, %v439
        %v450 = vsel %vm446, %v445, %v441
        %s451 = scalar_lea.vmem %s2, 6
        %v452 = vld [vmem:[%s451] ss:$8 sm:$0x3]
        %v454 = vlaneseq
        %v455 = vshrl.u32 %v454, 7
        %v456 = vsub.s32 0, %v455
        %v457 = vrot.slane %v452, %v456
        %v458 = vlaneseq
        %v459 = vshrl.u32 %v458, 7
        %v460 = vsub.s32 1, %v459
        %v461 = vrot.slane %v452, %v460
        %v464 = vmul.f32 %v447, %v457
        %v465 = vmul.f32 %v449, %v461
        %v466 = vmul.f32 %v448, %v457
        %v467 = vmul.f32 %v450, %v461
        %468 = vst [vmem:[#allocation2 + $0xc0] sm:$0xff] %v464
        %469 = vst [vmem:[#allocation2 + $0xc8] sm:$0xff] %v465
        %470 = vst [vmem:[#allocation2 + $0xd0] sm:$0xff] %v466
        %471 = vst [vmem:[#allocation2 + $0xd8] sm:$0xff] %v467
        %472 = vrot.lane.b32.xlu0 %v242, 112
        %v473 = vpop.permute.xlu0 %472
        %474 = vrot.lane.b32.xlu0 %v244, 112
        %v475 = vpop.permute.xlu0 %474
        %476 = vrot.lane.b32.xlu0 %v243, 112
        %v477 = vpop.permute.xlu0 %476
        %478 = vrot.lane.b32.xlu0 %v245, 112
        %v479 = vpop.permute.xlu0 %478
        %vm480 = vcmp.lt.s32.totalorder %v255, 112
        %v481 = vsel %vm480, %v473, %v477
        %v482 = vsel %vm480, %v475, %v479
        %v483 = vsel %vm480, %v477, %v473
        %v484 = vsel %vm480, %v479, %v475
        %s485 = scalar_lea.vmem %s2, 7
        %v486 = vld [vmem:[%s485] ss:$8 sm:$0x3]
        %v488 = vlaneseq
        %v489 = vshrl.u32 %v488, 7
        %v490 = vsub.s32 0, %v489
        %v491 = vrot.slane %v486, %v490
        %v492 = vlaneseq
        %v493 = vshrl.u32 %v492, 7
        %v494 = vsub.s32 1, %v493
        %v495 = vrot.slane %v486, %v494
        %v498 = vmul.f32 %v481, %v491
        %v499 = vmul.f32 %v483, %v495
        %v500 = vmul.f32 %v482, %v491
        %v501 = vmul.f32 %v484, %v495
        %502 = vst [vmem:[#allocation2 + $0xe0] sm:$0xff] %v498
        %503 = vst [vmem:[#allocation2 + $0xe8] sm:$0xff] %v499
        %504 = vst [vmem:[#allocation2 + $0xf0] sm:$0xff] %v500
        %505 = vst [vmem:[#allocation2 + $0xf8] sm:$0xff] %v501
        %506 = vrot.lane.b32.xlu0 %v242, 111
        %v507 = vpop.permute.xlu0 %506
        %508 = vrot.lane.b32.xlu0 %v244, 111
        %v509 = vpop.permute.xlu0 %508
        %510 = vrot.lane.b32.xlu0 %v243, 111
        %v511 = vpop.permute.xlu0 %510
        %512 = vrot.lane.b32.xlu0 %v245, 111
        %v513 = vpop.permute.xlu0 %512
        %vm514 = vcmp.lt.s32.totalorder %v255, 111
        %v515 = vsel %vm514, %v507, %v511
        %v516 = vsel %vm514, %v509, %v513
        %v517 = vsel %vm514, %v511, %v507
        %v518 = vsel %vm514, %v513, %v509
        %s519 = scalar_lea.vmem %s2, 16
        %v520 = vld [vmem:[%s519] ss:$8 sm:$0x3]
        %v522 = vlaneseq
        %v523 = vshrl.u32 %v522, 7
        %v524 = vsub.s32 0, %v523
        %v525 = vrot.slane %v520, %v524
        %v526 = vlaneseq
        %v527 = vshrl.u32 %v526, 7
        %v528 = vsub.s32 1, %v527
        %v529 = vrot.slane %v520, %v528
        %v532 = vmul.f32 %v515, %v525
        %v533 = vmul.f32 %v517, %v529
        %v534 = vmul.f32 %v516, %v525
        %v535 = vmul.f32 %v518, %v529
        %536 = vst [vmem:[#allocation2 + $0x100] sm:$0xff] %v532
        %537 = vst [vmem:[#allocation2 + $0x108] sm:$0xff] %v533
        %538 = vst [vmem:[#allocation2 + $0x110] sm:$0xff] %v534
        %539 = vst [vmem:[#allocation2 + $0x118] sm:$0xff] %v535
        %v540 = vld [vmem:[%s0] sm:$0xff]
        %v541 = vld [vmem:[%s0 + $0x8] sm:$0xff]
        %v542 = vld [vmem:[%s0 + $0x10] sm:$0xff]
        %v543 = vld [vmem:[%s0 + $0x18] sm:$0xff]
        %v544 = vld [vmem:[#allocation2] sm:$0xff]
        %v545 = vld [vmem:[#allocation2 + $0x8] sm:$0xff]
        %v546 = vld [vmem:[#allocation2 + $0x10] sm:$0xff]
        %v547 = vld [vmem:[#allocation2 + $0x18] sm:$0xff]
        %v548 = vld [vmem:[#allocation2 + $0x20] sm:$0xff]
        %v549 = vld [vmem:[#allocation2 + $0x28] sm:$0xff]
        %v550 = vld [vmem:[#allocation2 + $0x30] sm:$0xff]
        %v551 = vld [vmem:[#allocation2 + $0x38] sm:$0xff]
        %v552 = vld [vmem:[#allocation2 + $0x40] sm:$0xff]
        %v553 = vld [vmem:[#allocation2 + $0x48] sm:$0xff]
        %v554 = vld [vmem:[#allocation2 + $0x50] sm:$0xff]
        %v555 = vld [vmem:[#allocation2 + $0x58] sm:$0xff]
        %v556 = vld [vmem:[#allocation2 + $0x60] sm:$0xff]
        %v557 = vld [vmem:[#allocation2 + $0x68] sm:$0xff]
        %v558 = vld [vmem:[#allocation2 + $0x70] sm:$0xff]
        %v559 = vld [vmem:[#allocation2 + $0x78] sm:$0xff]
        %v560 = vld [vmem:[#allocation2 + $0x80] sm:$0xff]
        %v561 = vld [vmem:[#allocation2 + $0x88] sm:$0xff]
        %v562 = vld [vmem:[#allocation2 + $0x90] sm:$0xff]
        %v563 = vld [vmem:[#allocation2 + $0x98] sm:$0xff]
        %v564 = vld [vmem:[#allocation2 + $0xa0] sm:$0xff]
        %v565 = vld [vmem:[#allocation2 + $0xa8] sm:$0xff]
        %v566 = vld [vmem:[#allocation2 + $0xb0] sm:$0xff]
        %v567 = vld [vmem:[#allocation2 + $0xb8] sm:$0xff]
        %v568 = vld [vmem:[#allocation2 + $0xc0] sm:$0xff]
        %v569 = vld [vmem:[#allocation2 + $0xc8] sm:$0xff]
        %v570 = vld [vmem:[#allocation2 + $0xd0] sm:$0xff]
        %v571 = vld [vmem:[#allocation2 + $0xd8] sm:$0xff]
        %v572 = vld [vmem:[#allocation2 + $0xe0] sm:$0xff]
        %v573 = vld [vmem:[#allocation2 + $0xe8] sm:$0xff]
        %v574 = vld [vmem:[#allocation2 + $0xf0] sm:$0xff]
        %v575 = vld [vmem:[#allocation2 + $0xf8] sm:$0xff]
        %v576 = vld [vmem:[#allocation2 + $0x100] sm:$0xff]
        %v577 = vld [vmem:[#allocation2 + $0x108] sm:$0xff]
        %v578 = vld [vmem:[#allocation2 + $0x110] sm:$0xff]
        %v579 = vld [vmem:[#allocation2 + $0x118] sm:$0xff]
        %vm580 = vcmask 130048
        %v582 = vsel %vm580, %v541, 0
        %v585 = vsel %vm580, %v543, 0
        %587 = vmatprep.subr.mxu0 %v545
        %588 = vmatpush1.msra.mxu0 %v544
        %589 = vmatprep.subr.mxu0 %v547
        %590 = vmatpush1.msra.mxu0 %v546
        %591 = vmatprep.subr.mxu0 %v549
        %592 = vmatpush1.msra.mxu0 %v548
        %593 = vmatprep.subr.mxu0 %v551
        %594 = vmatpush1.msra.mxu0 %v550
        %595 = vmatprep.subr.mxu0 %v553
        %596 = vmatpush1.msra.mxu0 %v552
        %597 = vmatprep.subr.mxu0 %v555
        %598 = vmatpush1.msra.mxu0 %v554
        %599 = vmatprep.subr.mxu0 %v557
        %600 = vmatpush1.msra.mxu0 %v556
        %601 = vmatprep.subr.mxu0 %v559
        %602 = vmatpush1.msra.mxu0 %v558
        %603 = vmatprep.subr.mxu0 %v561
        %604 = vmatpush1.msra.mxu0 %v560
        %605 = vmatprep.subr.mxu0 %v563
        %606 = vmatpush1.msra.mxu0 %v562
        %607 = vmatprep.subr.mxu0 %v565
        %608 = vmatpush1.msra.mxu0 %v564
        %609 = vmatprep.subr.mxu0 %v567
        %610 = vmatpush1.msra.mxu0 %v566
        %611 = vmatprep.subr.mxu0 %v569
        %612 = vmatpush1.msra.mxu0 %v568
        %613 = vmatprep.subr.mxu0 %v571
        %614 = vmatpush1.msra.mxu0 %v570
        %615 = vmatprep.subr.mxu0 %v573
        %616 = vmatpush1.msra.mxu0 %v572
        %617 = vmatprep.subr.mxu0 %v575
        %618 = vmatpush1.msra.mxu0 %v574
        %619 = vmatprep.subr.mxu0 %v577
        %620 = vmatpush1.msra.mxu0 %v576
        %621 = vmatprep.subr.mxu0 %v579
        %622 = vmatpush1.msra.mxu0 %v578
        %623 = vmatprep.subr.mxu0 0.0
        %624 = vmatpush1.msra.mxu0 0.0
        %625 = vmatprep.subr.mxu0 0.0
        %626 = vmatpush1.msra.mxu0 0.0
        %627 = vmatprep.subr.mxu0 0.0
        %628 = vmatpush1.msra.mxu0 0.0
        %629 = vmatprep.subr.mxu0 0.0
        %630 = vmatpush1.msra.mxu0 0.0
        %631 = vmatprep.subr.mxu0 0.0
        %632 = vmatpush1.msra.mxu0 0.0
        %633 = vmatprep.subr.mxu0 0.0
        %634 = vmatpush1.msra.mxu0 0.0
        %635 = vmatprep.subr.mxu0 0.0
        %636 = vmatpush1.msra.mxu0 0.0
        %637 = vmatprep.subr.mxu0 0.0
        %638 = vmatpush1.msra.mxu0 0.0
        %639 = vmatprep.subr.mxu0 0.0
        %640 = vmatpush1.msra.mxu0 0.0
        %641 = vmatprep.subr.mxu0 0.0
        %642 = vmatpush1.msra.mxu0 0.0
        %643 = vmatprep.subr.mxu0 0.0
        %644 = vmatpush1.msra.mxu0 0.0
        %645 = vmatprep.subr.mxu0 0.0
        %646 = vmatpush1.msra.mxu0 0.0
        %647 = vmatprep.subr.mxu0 0.0
        %648 = vmatpush1.msra.mxu0 0.0
        %649 = vmatprep.subr.mxu0 0.0
        %650 = vmatpush1.msra.mxu0 0.0
        %651 = vmatprep.mubr.f32.mxu0 %v582
        %652 = vmatmul.mubr.f32.gmra.mrb[0].mxu0 %v540
        %v653 = vpop.f32.mrb[0].mxu0
        %v654 = vadd.f32 0.0, %v653
        %v655 = vpop.f32.mrb[0].mxu0
        %v656 = vadd.f32 0.0, %v655
        %657 = vmatprep.mubr.f32.mxu0 %v585
        %658 = vmatmul.mubr.f32.gmra.mrb[0].mxu0 %v542
        %v659 = vpop.f32.mrb[0].mxu0
        %v660 = vadd.f32 0.0, %v659
        %v661 = vpop.f32.mrb[0].mxu0
        %v662 = vadd.f32 0.0, %v661
        %663 = vdwg.mxu0
        %v664 = vadd.f32 %v654, %v656
        %665 = vadd.xlane.f32.xlu0 %v664
        %v666 = vpop.xlane.xlu0 %665
        %v667 = vadd.f32 %v660, %v662
        %668 = vadd.xlane.f32.xlu0 %v667
        %v669 = vpop.xlane.xlu0 %668
        %v670 = vmul.f32 %v666, 0.00390625
        %v671 = vmul.f32 %v669, 0.00390625
        %v672 = vsub.f32 %v654, %v670
        %v673 = vsub.f32 %v656, %v670
        %v674 = vsub.f32 %v660, %v671
        %v675 = vsub.f32 %v662, %v671
        %v676 = vmul.f32 %v672, %v672
        %v677 = vmul.f32 %v673, %v673
        %v678 = vmul.f32 %v674, %v674
        %v679 = vmul.f32 %v675, %v675
        %v680 = vadd.f32 %v676, %v677
        %681 = vadd.xlane.f32.xlu0 %v680
        %v682 = vpop.xlane.xlu0 %681
        %v683 = vadd.f32 %v678, %v679
        %684 = vadd.xlane.f32.xlu0 %v683
        %v685 = vpop.xlane.xlu0 %684
        %v686 = vmul.f32 %v682, 0.00390625
        %v687 = vmul.f32 %v685, 0.00390625
        %v688 = vadd.f32 %v686, 1e-05
        %v689 = vadd.f32 %v687, 1e-05
        %v690 = vrsqrt.pop %v688
        %v691 = vrsqrt.pop %v689
        %v692 = vmul.f32 %v672, %v690
        %v693 = vmul.f32 %v673, %v690
        %v694 = vmul.f32 %v674, %v691
        %v695 = vmul.f32 %v675, %v691
        %v696 = vmul.f32 %v692, 0.2
        %v697 = vmul.f32 %v693, 0.2
        %v698 = vmul.f32 %v694, 0.2
        %v699 = vmul.f32 %v695, 0.2
        %v700 = vmax.f32 %v692, %v696
        %v701 = vmax.f32 %v693, %v697
        %v702 = vmax.f32 %v694, %v698
        %v703 = vmax.f32 %v695, %v699
        %704 = vrot.lane.b32.xlu0 %v700, 17
        %v705 = vpop.permute.xlu0 %704
        %706 = vrot.lane.b32.xlu0 %v702, 17
        %v707 = vpop.permute.xlu0 %706
        %708 = vrot.lane.b32.xlu0 %v701, 17
        %v709 = vpop.permute.xlu0 %708
        %710 = vrot.lane.b32.xlu0 %v703, 17
        %v711 = vpop.permute.xlu0 %710
        %v712 = vsel %vm256, %v705, %v709
        %v713 = vsel %vm256, %v707, %v711
        %v714 = vsel %vm256, %v709, %v705
        %v715 = vsel %vm256, %v711, %v707
        %v716 = vld [vmem:[%s2] ss:$8 sm:$0x3]
        %v718 = vlaneseq
        %v719 = vshrl.u32 %v718, 7
        %v720 = vsub.s32 0, %v719
        %v721 = vrot.slane %v716, %v720
        %v722 = vlaneseq
        %v723 = vshrl.u32 %v722, 7
        %v724 = vsub.s32 1, %v723
        %v725 = vrot.slane %v716, %v724
        %v728 = vmul.f32 %v714, %v721
        %v729 = vmul.f32 %v712, %v725
        %v730 = vmul.f32 %v715, %v721
        %v731 = vmul.f32 %v713, %v725
        %732 = vst [vmem:[#allocation2] sm:$0xff] %v728
        %733 = vst [vmem:[#allocation2 + $0x8] sm:$0xff] %v729
        %734 = vst [vmem:[#allocation2 + $0x10] sm:$0xff] %v730
        %735 = vst [vmem:[#allocation2 + $0x18] sm:$0xff] %v731
        %736 = vrot.lane.b32.xlu0 %v700, 16
        %v737 = vpop.permute.xlu0 %736
        %738 = vrot.lane.b32.xlu0 %v702, 16
        %v739 = vpop.permute.xlu0 %738
        %740 = vrot.lane.b32.xlu0 %v701, 16
        %v741 = vpop.permute.xlu0 %740
        %742 = vrot.lane.b32.xlu0 %v703, 16
        %v743 = vpop.permute.xlu0 %742
        %v744 = vsel %vm289, %v737, %v741
        %v745 = vsel %vm289, %v739, %v743
        %v746 = vsel %vm289, %v741, %v737
        %v747 = vsel %vm289, %v743, %v739
        %v748 = vld [vmem:[%s294] ss:$8 sm:$0x3]
        %v750 = vlaneseq
        %v751 = vshrl.u32 %v750, 7
        %v752 = vsub.s32 0, %v751
        %v753 = vrot.slane %v748, %v752
        %v754 = vlaneseq
        %v755 = vshrl.u32 %v754, 7
        %v756 = vsub.s32 1, %v755
        %v757 = vrot.slane %v748, %v756
        %v760 = vmul.f32 %v746, %v753
        %v761 = vmul.f32 %v744, %v757
        %v762 = vmul.f32 %v747, %v753
        %v763 = vmul.f32 %v745, %v757
        %764 = vst [vmem:[#allocation2 + $0x20] sm:$0xff] %v760
        %765 = vst [vmem:[#allocation2 + $0x28] sm:$0xff] %v761
        %766 = vst [vmem:[#allocation2 + $0x30] sm:$0xff] %v762
        %767 = vst [vmem:[#allocation2 + $0x38] sm:$0xff] %v763
        %768 = vrot.lane.b32.xlu0 %v700, 15
        %v769 = vpop.permute.xlu0 %768
        %770 = vrot.lane.b32.xlu0 %v702, 15
        %v771 = vpop.permute.xlu0 %770
        %772 = vrot.lane.b32.xlu0 %v701, 15
        %v773 = vpop.permute.xlu0 %772
        %774 = vrot.lane.b32.xlu0 %v703, 15
        %v775 = vpop.permute.xlu0 %774
        %v776 = vsel %vm323, %v769, %v773
        %v777 = vsel %vm323, %v771, %v775
        %v778 = vsel %vm323, %v773, %v769
        %v779 = vsel %vm323, %v775, %v771
        %v780 = vld [vmem:[%s328] ss:$8 sm:$0x3]
        %v782 = vlaneseq
        %v783 = vshrl.u32 %v782, 7
        %v784 = vsub.s32 0, %v783
        %v785 = vrot.slane %v780, %v784
        %v786 = vlaneseq
        %v787 = vshrl.u32 %v786, 7
        %v788 = vsub.s32 1, %v787
        %v789 = vrot.slane %v780, %v788
        %v792 = vmul.f32 %v778, %v785
        %v793 = vmul.f32 %v776, %v789
        %v794 = vmul.f32 %v779, %v785
        %v795 = vmul.f32 %v777, %v789
        %796 = vst [vmem:[#allocation2 + $0x40] sm:$0xff] %v792
        %797 = vst [vmem:[#allocation2 + $0x48] sm:$0xff] %v793
        %798 = vst [vmem:[#allocation2 + $0x50] sm:$0xff] %v794
        %799 = vst [vmem:[#allocation2 + $0x58] sm:$0xff] %v795
        %800 = vrot.lane.b32.xlu0 %v700, 1
        %v801 = vpop.permute.xlu0 %800
        %802 = vrot.lane.b32.xlu0 %v702, 1
        %v803 = vpop.permute.xlu0 %802
        %804 = vrot.lane.b32.xlu0 %v701, 1
        %v805 = vpop.permute.xlu0 %804
        %806 = vrot.lane.b32.xlu0 %v703, 1
        %v807 = vpop.permute.xlu0 %806
        %v808 = vsel %vm357, %v801, %v805
        %v809 = vsel %vm357, %v803, %v807
        %v810 = vsel %vm357, %v805, %v801
        %v811 = vsel %vm357, %v807, %v803
        %v812 = vld [vmem:[%s362] ss:$8 sm:$0x3]
        %v814 = vlaneseq
        %v815 = vshrl.u32 %v814, 7
        %v816 = vsub.s32 0, %v815
        %v817 = vrot.slane %v812, %v816
        %v818 = vlaneseq
        %v819 = vshrl.u32 %v818, 7
        %v820 = vsub.s32 1, %v819
        %v821 = vrot.slane %v812, %v820
        %v824 = vmul.f32 %v810, %v817
        %v825 = vmul.f32 %v808, %v821
        %v826 = vmul.f32 %v811, %v817
        %v827 = vmul.f32 %v809, %v821
        %828 = vst [vmem:[#allocation2 + $0x60] sm:$0xff] %v824
        %829 = vst [vmem:[#allocation2 + $0x68] sm:$0xff] %v825
        %830 = vst [vmem:[#allocation2 + $0x70] sm:$0xff] %v826
        %831 = vst [vmem:[#allocation2 + $0x78] sm:$0xff] %v827
        %v832 = vld [vmem:[%s383] ss:$8 sm:$0x3]
        %v834 = vlaneseq
        %v835 = vshrl.u32 %v834, 7
        %v836 = vsub.s32 0, %v835
        %v837 = vrot.slane %v832, %v836
        %v838 = vlaneseq
        %v839 = vshrl.u32 %v838, 7
        %v840 = vsub.s32 1, %v839
        %v841 = vrot.slane %v832, %v840
        %v844 = vmul.f32 %v700, %v837
        %v845 = vmul.f32 %v701, %v841
        %v846 = vmul.f32 %v702, %v837
        %v847 = vmul.f32 %v703, %v841
        %848 = vst [vmem:[#allocation2 + $0x80] sm:$0xff] %v844
        %849 = vst [vmem:[#allocation2 + $0x88] sm:$0xff] %v845
        %850 = vst [vmem:[#allocation2 + $0x90] sm:$0xff] %v846
        %851 = vst [vmem:[#allocation2 + $0x98] sm:$0xff] %v847
        %852 = vrot.lane.b32.xlu0 %v700, 127
        %v853 = vpop.permute.xlu0 %852
        %854 = vrot.lane.b32.xlu0 %v702, 127
        %v855 = vpop.permute.xlu0 %854
        %856 = vrot.lane.b32.xlu0 %v701, 127
        %v857 = vpop.permute.xlu0 %856
        %858 = vrot.lane.b32.xlu0 %v703, 127
        %v859 = vpop.permute.xlu0 %858
        %v860 = vsel %vm412, %v853, %v857
        %v861 = vsel %vm412, %v855, %v859
        %v862 = vsel %vm412, %v857, %v853
        %v863 = vsel %vm412, %v859, %v855
        %v864 = vld [vmem:[%s417] ss:$8 sm:$0x3]
        %v866 = vlaneseq
        %v867 = vshrl.u32 %v866, 7
        %v868 = vsub.s32 0, %v867
        %v869 = vrot.slane %v864, %v868
        %v870 = vlaneseq
        %v871 = vshrl.u32 %v870, 7
        %v872 = vsub.s32 1, %v871
        %v873 = vrot.slane %v864, %v872
        %v876 = vmul.f32 %v860, %v869
        %v877 = vmul.f32 %v862, %v873
        %v878 = vmul.f32 %v861, %v869
        %v879 = vmul.f32 %v863, %v873
        %880 = vst [vmem:[#allocation2 + $0xa0] sm:$0xff] %v876
        %881 = vst [vmem:[#allocation2 + $0xa8] sm:$0xff] %v877
        %882 = vst [vmem:[#allocation2 + $0xb0] sm:$0xff] %v878
        %883 = vst [vmem:[#allocation2 + $0xb8] sm:$0xff] %v879
        %884 = vrot.lane.b32.xlu0 %v700, 113
        %v885 = vpop.permute.xlu0 %884
        %886 = vrot.lane.b32.xlu0 %v702, 113
        %v887 = vpop.permute.xlu0 %886
        %888 = vrot.lane.b32.xlu0 %v701, 113
        %v889 = vpop.permute.xlu0 %888
        %890 = vrot.lane.b32.xlu0 %v703, 113
        %v891 = vpop.permute.xlu0 %890
        %v892 = vsel %vm446, %v885, %v889
        %v893 = vsel %vm446, %v887, %v891
        %v894 = vsel %vm446, %v889, %v885
        %v895 = vsel %vm446, %v891, %v887
        %v896 = vld [vmem:[%s451] ss:$8 sm:$0x3]
        %v898 = vlaneseq
        %v899 = vshrl.u32 %v898, 7
        %v900 = vsub.s32 0, %v899
        %v901 = vrot.slane %v896, %v900
        %v902 = vlaneseq
        %v903 = vshrl.u32 %v902, 7
        %v904 = vsub.s32 1, %v903
        %v905 = vrot.slane %v896, %v904
        %v908 = vmul.f32 %v892, %v901
        %v909 = vmul.f32 %v894, %v905
        %v910 = vmul.f32 %v893, %v901
        %v911 = vmul.f32 %v895, %v905
        %912 = vst [vmem:[#allocation2 + $0xc0] sm:$0xff] %v908
        %913 = vst [vmem:[#allocation2 + $0xc8] sm:$0xff] %v909
        %914 = vst [vmem:[#allocation2 + $0xd0] sm:$0xff] %v910
        %915 = vst [vmem:[#allocation2 + $0xd8] sm:$0xff] %v911
        %916 = vrot.lane.b32.xlu0 %v700, 112
        %v917 = vpop.permute.xlu0 %916
        %918 = vrot.lane.b32.xlu0 %v702, 112
        %v919 = vpop.permute.xlu0 %918
        %920 = vrot.lane.b32.xlu0 %v701, 112
        %v921 = vpop.permute.xlu0 %920
        %922 = vrot.lane.b32.xlu0 %v703, 112
        %v923 = vpop.permute.xlu0 %922
        %v924 = vsel %vm480, %v917, %v921
        %v925 = vsel %vm480, %v919, %v923
        %v926 = vsel %vm480, %v921, %v917
        %v927 = vsel %vm480, %v923, %v919
        %v928 = vld [vmem:[%s485] ss:$8 sm:$0x3]
        %v930 = vlaneseq
        %v931 = vshrl.u32 %v930, 7
        %v932 = vsub.s32 0, %v931
        %v933 = vrot.slane %v928, %v932
        %v934 = vlaneseq
        %v935 = vshrl.u32 %v934, 7
        %v936 = vsub.s32 1, %v935
        %v937 = vrot.slane %v928, %v936
        %v940 = vmul.f32 %v924, %v933
        %v941 = vmul.f32 %v926, %v937
        %v942 = vmul.f32 %v925, %v933
        %v943 = vmul.f32 %v927, %v937
        %944 = vst [vmem:[#allocation2 + $0xe0] sm:$0xff] %v940
        %945 = vst [vmem:[#allocation2 + $0xe8] sm:$0xff] %v941
        %946 = vst [vmem:[#allocation2 + $0xf0] sm:$0xff] %v942
        %947 = vst [vmem:[#allocation2 + $0xf8] sm:$0xff] %v943
        %948 = vrot.lane.b32.xlu0 %v700, 111
        %v949 = vpop.permute.xlu0 %948
        %950 = vrot.lane.b32.xlu0 %v702, 111
        %v951 = vpop.permute.xlu0 %950
        %952 = vrot.lane.b32.xlu0 %v701, 111
        %v953 = vpop.permute.xlu0 %952
        %954 = vrot.lane.b32.xlu0 %v703, 111
        %v955 = vpop.permute.xlu0 %954
        %v956 = vsel %vm514, %v949, %v953
        %v957 = vsel %vm514, %v951, %v955
        %v958 = vsel %vm514, %v953, %v949
        %v959 = vsel %vm514, %v955, %v951
        %v960 = vld [vmem:[%s519] ss:$8 sm:$0x3]
        %v962 = vlaneseq
        %v963 = vshrl.u32 %v962, 7
        %v964 = vsub.s32 0, %v963
        %v965 = vrot.slane %v960, %v964
        %v966 = vlaneseq
        %v967 = vshrl.u32 %v966, 7
        %v968 = vsub.s32 1, %v967
        %v969 = vrot.slane %v960, %v968
        %v972 = vmul.f32 %v956, %v965
        %v973 = vmul.f32 %v958, %v969
        %v974 = vmul.f32 %v957, %v965
        %v975 = vmul.f32 %v959, %v969
        %976 = vst [vmem:[#allocation2 + $0x100] sm:$0xff] %v972
        %977 = vst [vmem:[#allocation2 + $0x108] sm:$0xff] %v973
        %978 = vst [vmem:[#allocation2 + $0x110] sm:$0xff] %v974
        %979 = vst [vmem:[#allocation2 + $0x118] sm:$0xff] %v975
        %v980 = vld [vmem:[%s1] sm:$0xff]
        %v981 = vld [vmem:[%s1 + $0x8] sm:$0xff]
        %v982 = vld [vmem:[%s1 + $0x10] sm:$0xff]
        %v983 = vld [vmem:[%s1 + $0x18] sm:$0xff]
        %v984 = vld [vmem:[#allocation2] sm:$0xff]
        %v985 = vld [vmem:[#allocation2 + $0x8] sm:$0xff]
        %v986 = vld [vmem:[#allocation2 + $0x10] sm:$0xff]
        %v987 = vld [vmem:[#allocation2 + $0x18] sm:$0xff]
        %v988 = vld [vmem:[#allocation2 + $0x20] sm:$0xff]
        %v989 = vld [vmem:[#allocation2 + $0x28] sm:$0xff]
        %v990 = vld [vmem:[#allocation2 + $0x30] sm:$0xff]
        %v991 = vld [vmem:[#allocation2 + $0x38] sm:$0xff]
        %v992 = vld [vmem:[#allocation2 + $0x40] sm:$0xff]
        %v993 = vld [vmem:[#allocation2 + $0x48] sm:$0xff]
        %v994 = vld [vmem:[#allocation2 + $0x50] sm:$0xff]
        %v995 = vld [vmem:[#allocation2 + $0x58] sm:$0xff]
        %v996 = vld [vmem:[#allocation2 + $0x60] sm:$0xff]
        %v997 = vld [vmem:[#allocation2 + $0x68] sm:$0xff]
        %v998 = vld [vmem:[#allocation2 + $0x70] sm:$0xff]
        %v999 = vld [vmem:[#allocation2 + $0x78] sm:$0xff]
        %v1000 = vld [vmem:[#allocation2 + $0x80] sm:$0xff]
        %v1001 = vld [vmem:[#allocation2 + $0x88] sm:$0xff]
        %v1002 = vld [vmem:[#allocation2 + $0x90] sm:$0xff]
        %v1003 = vld [vmem:[#allocation2 + $0x98] sm:$0xff]
        %v1004 = vld [vmem:[#allocation2 + $0xa0] sm:$0xff]
        %v1005 = vld [vmem:[#allocation2 + $0xa8] sm:$0xff]
        %v1006 = vld [vmem:[#allocation2 + $0xb0] sm:$0xff]
        %v1007 = vld [vmem:[#allocation2 + $0xb8] sm:$0xff]
        %v1008 = vld [vmem:[#allocation2 + $0xc0] sm:$0xff]
        %v1009 = vld [vmem:[#allocation2 + $0xc8] sm:$0xff]
        %v1010 = vld [vmem:[#allocation2 + $0xd0] sm:$0xff]
        %v1011 = vld [vmem:[#allocation2 + $0xd8] sm:$0xff]
        %v1012 = vld [vmem:[#allocation2 + $0xe0] sm:$0xff]
        %v1013 = vld [vmem:[#allocation2 + $0xe8] sm:$0xff]
        %v1014 = vld [vmem:[#allocation2 + $0xf0] sm:$0xff]
        %v1015 = vld [vmem:[#allocation2 + $0xf8] sm:$0xff]
        %v1016 = vld [vmem:[#allocation2 + $0x100] sm:$0xff]
        %v1017 = vld [vmem:[#allocation2 + $0x108] sm:$0xff]
        %v1018 = vld [vmem:[#allocation2 + $0x110] sm:$0xff]
        %v1019 = vld [vmem:[#allocation2 + $0x118] sm:$0xff]
        %v1021 = vsel %vm580, %v981, 0
        %v1024 = vsel %vm580, %v983, 0
        %1026 = vmatprep.subr.mxu0 %v985
        %1027 = vmatpush1.msra.mxu0 %v984
        %1028 = vmatprep.subr.mxu0 %v987
        %1029 = vmatpush1.msra.mxu0 %v986
        %1030 = vmatprep.subr.mxu0 %v989
        %1031 = vmatpush1.msra.mxu0 %v988
        %1032 = vmatprep.subr.mxu0 %v991
        %1033 = vmatpush1.msra.mxu0 %v990
        %1034 = vmatprep.subr.mxu0 %v993
        %1035 = vmatpush1.msra.mxu0 %v992
        %1036 = vmatprep.subr.mxu0 %v995
        %1037 = vmatpush1.msra.mxu0 %v994
        %1038 = vmatprep.subr.mxu0 %v997
        %1039 = vmatpush1.msra.mxu0 %v996
        %1040 = vmatprep.subr.mxu0 %v999
        %1041 = vmatpush1.msra.mxu0 %v998
        %1042 = vmatprep.subr.mxu0 %v1001
        %1043 = vmatpush1.msra.mxu0 %v1000
        %1044 = vmatprep.subr.mxu0 %v1003
        %1045 = vmatpush1.msra.mxu0 %v1002
        %1046 = vmatprep.subr.mxu0 %v1005
        %1047 = vmatpush1.msra.mxu0 %v1004
        %1048 = vmatprep.subr.mxu0 %v1007
        %1049 = vmatpush1.msra.mxu0 %v1006
        %1050 = vmatprep.subr.mxu0 %v1009
        %1051 = vmatpush1.msra.mxu0 %v1008
        %1052 = vmatprep.subr.mxu0 %v1011
        %1053 = vmatpush1.msra.mxu0 %v1010
        %1054 = vmatprep.subr.mxu0 %v1013
        %1055 = vmatpush1.msra.mxu0 %v1012
        %1056 = vmatprep.subr.mxu0 %v1015
        %1057 = vmatpush1.msra.mxu0 %v1014
        %1058 = vmatprep.subr.mxu0 %v1017
        %1059 = vmatpush1.msra.mxu0 %v1016
        %1060 = vmatprep.subr.mxu0 %v1019
        %1061 = vmatpush1.msra.mxu0 %v1018
        %1062 = vmatprep.subr.mxu0 0.0
        %1063 = vmatpush1.msra.mxu0 0.0
        %1064 = vmatprep.subr.mxu0 0.0
        %1065 = vmatpush1.msra.mxu0 0.0
        %1066 = vmatprep.subr.mxu0 0.0
        %1067 = vmatpush1.msra.mxu0 0.0
        %1068 = vmatprep.subr.mxu0 0.0
        %1069 = vmatpush1.msra.mxu0 0.0
        %1070 = vmatprep.subr.mxu0 0.0
        %1071 = vmatpush1.msra.mxu0 0.0
        %1072 = vmatprep.subr.mxu0 0.0
        %1073 = vmatpush1.msra.mxu0 0.0
        %1074 = vmatprep.subr.mxu0 0.0
        %1075 = vmatpush1.msra.mxu0 0.0
        %1076 = vmatprep.subr.mxu0 0.0
        %1077 = vmatpush1.msra.mxu0 0.0
        %1078 = vmatprep.subr.mxu0 0.0
        %1079 = vmatpush1.msra.mxu0 0.0
        %1080 = vmatprep.subr.mxu0 0.0
        %1081 = vmatpush1.msra.mxu0 0.0
        %1082 = vmatprep.subr.mxu0 0.0
        %1083 = vmatpush1.msra.mxu0 0.0
        %1084 = vmatprep.subr.mxu0 0.0
        %1085 = vmatpush1.msra.mxu0 0.0
        %1086 = vmatprep.subr.mxu0 0.0
        %1087 = vmatpush1.msra.mxu0 0.0
        %1088 = vmatprep.subr.mxu0 0.0
        %1089 = vmatpush1.msra.mxu0 0.0
        %1090 = vmatprep.mubr.f32.mxu0 %v1021
        %1091 = vmatmul.mubr.f32.gmra.mrb[0].mxu0 %v980
        %v1092 = vpop.f32.mrb[0].mxu0
        %v1093 = vadd.f32 0.0, %v1092
        %v1094 = vpop.f32.mrb[0].mxu0
        %v1095 = vadd.f32 0.0, %v1094
        %1096 = vmatprep.mubr.f32.mxu0 %v1024
        %1097 = vmatmul.mubr.f32.gmra.mrb[0].mxu0 %v982
        %v1098 = vpop.f32.mrb[0].mxu0
        %v1099 = vadd.f32 0.0, %v1098
        %v1100 = vpop.f32.mrb[0].mxu0
        %v1101 = vadd.f32 0.0, %v1100
        %1102 = vdwg.mxu0
        %1103 = vst [vmem:[%s226] sm:$0xff] %v1093
        %1104 = vst [vmem:[%s226 + $0x8] sm:$0xff] %v1095
        %1105 = vst [vmem:[%s226 + $0x10] sm:$0xff] %v1099
        %1106 = vst [vmem:[%s226 + $0x18] sm:$0xff] %v1101
        %v1107 = vld [vmem:[%s226 + $0x10] sm:$0xf0]
        %v1108 = vld [vmem:[%s226 + $0x18] sm:$0xf0]
        %v1109 = vld [vmem:[%s231] sm:$0xff]
        %v1111 = vcombine.low %v1109, %v1109
        %v1113 = vadd.f32 %v1107, %v1111
        %v1114 = vadd.f32 %v1108, %v1109
        %1115 = vst [vmem:[%s226 + $0x10] sm:$0xf0] %v1113
        %1116 = vst [vmem:[%s226 + $0x18] sm:$0xf0] %v1114
        %v1117 = vld [vmem:[%s226] sm:$0xf]
        %v1118 = vld [vmem:[%s226 + $0x8] sm:$0xf]
        %v1119 = vld [vmem:[%s4] sm:$0xff]
        %v1121 = vcombine.high %v1119, %v1119
        %v1123 = vadd.f32 %v1117, %v1119
        %v1124 = vadd.f32 %v1118, %v1121
        %1125 = vst [vmem:[%s226] sm:$0xf] %v1123
        %1126 = vst [vmem:[%s226 + $0x8] sm:$0xf] %v1124
        %v1127 = vld [vmem:[%s226] sm:$0xf]
        %v1128 = vld [vmem:[%s226 + $0x8] sm:$0xf]
        %v1129 = vmul.f32 %v1127, 0.70710677
        %v1130 = vmul.f32 %v1128, 0.70710677
        %1131 = vst [vmem:[%s226] sm:$0xf] %v1129
        %1132 = vst [vmem:[%s226 + $0x8] sm:$0xf] %v1130
        %v1133 = vld [vmem:[%s226] sm:$0xf]
        %v1134 = vld [vmem:[%s226 + $0x8] sm:$0xf]
        %v1135 = vmul.f32 %v1133, 0.70710677
        %v1136 = vmul.f32 %v1134, 0.70710677
        %v1137 = vld [vmem:[%s226] sm:$0xf0]
        %v1138 = vld [vmem:[%s226 + $0x8] sm:$0xf0]
        %v1141 = vrot.slane %v1137, 4
        %v1142 = vrot.slane %v1138, 4
        %v1145 = vadd.f32 %v1135, %v1141
        %v1146 = vadd.f32 %v1136, %v1142
        %v1147 = vmul.f32 %v1145, 0.8164966
        %v1148 = vmul.f32 %v1146, 0.8164966
        %v1151 = vrot.slane %v1147, 4
        %v1152 = vrot.slane %v1148, 4
        %1155 = vst [vmem:[%s226] sm:$0xf0] %v1151
        %1156 = vst [vmem:[%s226 + $0x8] sm:$0xf0] %v1152
        %v1157 = vld [vmem:[%s226] sm:$0xf0]
        %v1158 = vld [vmem:[%s226 + $0x8] sm:$0xf0]
        %v1159 = vmul.f32 %v1157, 0.8164966
        %v1160 = vmul.f32 %v1158, 0.8164966
        %v1161 = vld [vmem:[%s226 + $0x10] sm:$0xf]
        %v1162 = vld [vmem:[%s226 + $0x18] sm:$0xf]
        %v1165 = vrot.slane %v1161, 4
        %v1166 = vrot.slane %v1162, 4
        %v1169 = vadd.f32 %v1159, %v1165
        %v1170 = vadd.f32 %v1160, %v1166
        %v1171 = vmul.f32 %v1169, 0.8660254
        %v1172 = vmul.f32 %v1170, 0.8660254
        %v1175 = vrot.slane %v1171, 4
        %v1176 = vrot.slane %v1172, 4
        %1179 = vst [vmem:[%s226 + $0x10] sm:$0xf] %v1175
        %1180 = vst [vmem:[%s226 + $0x18] sm:$0xf] %v1176
        %v1181 = vld [vmem:[%s226 + $0x10] sm:$0xf]
        %v1182 = vld [vmem:[%s226 + $0x18] sm:$0xf]
        %v1183 = vmul.f32 %v1181, 0.8660254
        %v1184 = vmul.f32 %v1182, 0.8660254
        %v1185 = vld [vmem:[%s226 + $0x10] sm:$0xf0]
        %v1186 = vld [vmem:[%s226 + $0x18] sm:$0xf0]
        %v1189 = vrot.slane %v1185, 4
        %v1190 = vrot.slane %v1186, 4
        %v1193 = vadd.f32 %v1183, %v1189
        %v1194 = vadd.f32 %v1184, %v1190
        %v1195 = vmul.f32 %v1193, 0.8944272
        %v1196 = vmul.f32 %v1194, 0.8944272
        %v1199 = vrot.slane %v1195, 4
        %v1200 = vrot.slane %v1196, 4
        %1203 = vst [vmem:[%s226 + $0x10] sm:$0xf0] %v1199
        %1204 = vst [vmem:[%s226 + $0x18] sm:$0xf0] %v1200
        %v1205 = vld [vmem:[%s226 + $0x10] sm:$0xf0]
        %v1206 = vld [vmem:[%s226 + $0x18] sm:$0xf0]
        %v1207 = vmul.f32 %v1205, 0.8944272
        %v1208 = vmul.f32 %v1206, 0.8944272
        %1209 = vst [vmem:[%s226 + $0x10] sm:$0xf0] %v1207
        %1210 = vst [vmem:[%s226 + $0x18] sm:$0xf0] %v1208
        %v1211 = vld [vmem:[%s226 + $0x10] sm:$0xf0]
        %v1212 = vld [vmem:[%s226 + $0x18] sm:$0xf0]
        %v1213 = vmul.f32 %v1211, 0.8660254
        %v1214 = vmul.f32 %v1212, 0.8660254
        %v1215 = vld [vmem:[%s226 + $0x10] sm:$0xf]
        %v1216 = vld [vmem:[%s226 + $0x18] sm:$0xf]
        %v1219 = vrot.slane %v1215, 4
        %v1220 = vrot.slane %v1216, 4
        %v1223 = vadd.f32 %v1213, %v1219
        %v1224 = vadd.f32 %v1214, %v1220
        %v1225 = vmul.f32 %v1223, 0.8660254
        %v1226 = vmul.f32 %v1224, 0.8660254
        %v1229 = vrot.slane %v1225, 4
        %v1230 = vrot.slane %v1226, 4
        %1233 = vst [vmem:[%s226 + $0x10] sm:$0xf] %v1229
        %1234 = vst [vmem:[%s226 + $0x18] sm:$0xf] %v1230
        %v1235 = vld [vmem:[%s226 + $0x10] sm:$0xf]
        %v1236 = vld [vmem:[%s226 + $0x18] sm:$0xf]
        %v1237 = vmul.f32 %v1235, 0.8164966
        %v1238 = vmul.f32 %v1236, 0.8164966
        %v1239 = vld [vmem:[%s226] sm:$0xf0]
        %v1240 = vld [vmem:[%s226 + $0x8] sm:$0xf0]
        %v1243 = vrot.slane %v1239, 4
        %v1244 = vrot.slane %v1240, 4
        %v1247 = vadd.f32 %v1237, %v1243
        %v1248 = vadd.f32 %v1238, %v1244
        %v1249 = vmul.f32 %v1247, 0.8164966
        %v1250 = vmul.f32 %v1248, 0.8164966
        %v1253 = vrot.slane %v1249, 4
        %v1254 = vrot.slane %v1250, 4
        %1257 = vst [vmem:[%s226] sm:$0xf0] %v1253
        %1258 = vst [vmem:[%s226 + $0x8] sm:$0xf0] %v1254
        %v1259 = vld [vmem:[%s226] sm:$0xf0]
        %v1260 = vld [vmem:[%s226 + $0x8] sm:$0xf0]
        %v1261 = vmul.f32 %v1259, 0.70710677
        %v1262 = vmul.f32 %v1260, 0.70710677
        %v1263 = vld [vmem:[%s226] sm:$0xf]
        %v1264 = vld [vmem:[%s226 + $0x8] sm:$0xf]
        %v1267 = vrot.slane %v1263, 4
        %v1268 = vrot.slane %v1264, 4
        %v1271 = vadd.f32 %v1261, %v1267
        %v1272 = vadd.f32 %v1262, %v1268
        %v1273 = vmul.f32 %v1271, 0.70710677
        %v1274 = vmul.f32 %v1272, 0.70710677
        %v1277 = vrot.slane %v1273, 4
        %v1278 = vrot.slane %v1274, 4
        %1281 = vst [vmem:[%s226] sm:$0xf] %v1277
        %1282 = vst [vmem:[%s226 + $0x8] sm:$0xf] %v1278
        %s1283 = sand.u32 %s146, 1
        %s1284 = sand.u32 %s146, 1
        %s1285 = smul.addr %s1284, 32
        %s1286 = scalar_lea.vmem [#allocation3], %s1285
        // Predicated region
        $region45: #{least_action_forward.1} parent=39 // pred_check
          %p1287 = pneg %p156
        $region46: #{least_action_forward.1} parent=39 // pred_check_branch
          %1289 = sbr.rel (%p1287) target = $region48
        $region47: #{least_action_forward.1} parent=39 // pred_region
          %s1290 = smul.u32 2, %s20
          %s1291 = smul.addr %s1290, 8
          %s1292 = scalar_lea.vmem %s5, %s1291
          // Predicated region
          $region49: #{least_action_forward.1} parent=47 // pred_check
            _
          $region50: #{least_action_forward.1} parent=47 // pred_check_branch
            %1294 = sbr.rel (0) target = $region52
          $region51: #{least_action_forward.1} parent=47 // pred_region
            // Predicated region
            $region53: #{least_action_forward.1} parent=51 // pred_check
              _
            $region54: #{least_action_forward.1} parent=51 // pred_check_branch
              %1296 = sbr.rel (0) target = $region56
            $region55: #{least_action_forward.1} parent=51 // pred_region
              loop: start=0, step=1, limit=1
              $region57: #{least_action_forward.1} parent=55 // loop_pre_header
                _
              $region58: #{least_action_forward.1} parent=55 // loop_header
                %s1298 = sphi 0, %s1302
                %p1299 = scmp.ge.s32.totalorder %s1298, 1
                %s1303 = sphi %s1286, %s1286
                %s1304 = sphi %s1292, %s1292
              $region59: #{least_action_forward.1} parent=55 // loop_header_branch
                %1301 = sbr.rel (%p1299) target = $region63
              $region60: #{least_action_forward.1} parent=55 // loop_body
                %v1305 = vld [vmem:[%s1303] sm:$0xff]
                %1306 = vst [vmem:[%s1304] sm:$0xff] %v1305
                %v1307 = vld [vmem:[%s1303 + $0x8] sm:$0xff]
                %1308 = vst [vmem:[%s1304 + $0x8] sm:$0xff] %v1307
                %v1309 = vld [vmem:[%s1303 + $0x10] sm:$0xff]
                %1310 = vst [vmem:[%s1304 + $0x20] sm:$0xff] %v1309
                %v1311 = vld [vmem:[%s1303 + $0x18] sm:$0xff]
                %1312 = vst [vmem:[%s1304 + $0x28] sm:$0xff] %v1311
              $region61: #{least_action_forward.1} parent=55 // loop_footer
                %s1302 = sadd.s32 1, %s1298
              $region62: #{least_action_forward.1} parent=55 // loop_footer_branch
                %1297 = sbr.rel target = $region58
              $region63: #{least_action_forward.1} parent=55 // loop_exit
                _
            $region56: #{least_action_forward.1} parent=51 // pred_fallthru
              _
            // Predicated region
            $region64: #{least_action_forward.1} parent=51 // pred_check
              _
            $region65: #{least_action_forward.1} parent=51 // pred_check_branch
              %1314 = sbr.rel target = $region67
            $region66: #{least_action_forward.1} parent=51 // pred_region
              _
            $region67: #{least_action_forward.1} parent=51 // pred_fallthru
              _
          $region52: #{least_action_forward.1} parent=47 // pred_fallthru
            _
          %1315 = vnop
        $region48: #{least_action_forward.1} parent=39 // pred_fallthru
          _
      $region40: #{least_action_forward.1} parent=5 // pred_fallthru
        _
      %p1316 = scmp.le.s32.totalorder 2, %s11
      // Predicated region
      $region68: #{least_action_forward.1} parent=5 // pred_check
        %p1317 = pneg %p1316
      $region69: #{least_action_forward.1} parent=5 // pred_check_branch
        %1319 = sbr.rel (%p1317) target = $region71
      $region70: #{least_action_forward.1} parent=5 // pred_region
        %s1320 = ssub.s32 %s11, 2
        // Predicated region
        $region72: #{least_action_forward.1} parent=70 // pred_check
          %p1321 = pneg %p162
        $region73: #{least_action_forward.1} parent=70 // pred_check_branch
          %1323 = sbr.rel (%p1321) target = $region75
        $region74: #{least_action_forward.1} parent=70 // pred_region
          %s1324 = sand.u32 %s147, 1
          %s1325 = sand.u32 %s147, 1
          %s1326 = smul.addr %s1325, 32
          %s1327 = scalar_lea.vmem [#allocation3], %s1326
        $region75: #{least_action_forward.1} parent=70 // pred_fallthru
          _
      $region71: #{least_action_forward.1} parent=5 // pred_fallthru
        _
    $region6: #{least_action_forward.1} parent=1 // loop_footer
      %s15 = sadd.s32 1, %s11
    $region7: #{least_action_forward.1} parent=1 // loop_footer_branch
      %10 = sbr.rel target = $region3
    $region8: #{least_action_forward.1} parent=1 // loop_exit
      _

</llo_original>
